<compile_context>
chip_gen: v7x
topology: tpu7x:2x2x1
jax: 0.10.0
libtpu: 0.0.40
codegen_flags: <defaults>
</compile_context>

<pallas_src>
import jax
import jax.numpy as jnp
from jax.experimental import pallas as pl
from jax.experimental.pallas import tpu as pltpu

HIDDEN = 32      # hidden_unit
DROPOUT = 0.5    # unused at inference (eval-mode identity)

H_IN, W_IN = 60, 4
H1 = H_IN - 7 + 1          # 54  (conv1, kernel (7,4) -> W collapses to 1)
P1 = H1 // 3               # 18  (maxpool (3,1), floor)
H2 = P1 - 3 + 1            # 16  (conv2, kernel (3,1))
P2 = H2 // 3               # 5   (maxpool (3,1), floor -> conv2 row 15 dropped)
H3 = P2 - 3 + 1            # 3   (conv3, kernel (3,1))

C1, C2, C3 = 16, 32, 64

# Lane-aligned sizes (all multiples of 128).
K_IN = 256                 # x lanes: 240 real + 16 zero pad
G1 = 384                   # conv1 pool group width: 18*16 = 288 real + 96 zero pad
N1 = 3 * G1                # 1152 conv1 output lanes (3 pool-candidate groups)
G2 = 256                   # conv2 pool group width: 5*32 = 160 real + 96 zero pad
N2 = 3 * G2                # 768
G3 = 128                   # conv3 pool group width: 64 real + 64 zero pad
N3 = 3 * G3                # 384
HID_PAD = 128              # FC1 output lanes (32 real)
OUT_PAD = 128              # FC2 output lanes (2 real) -> lane-dense store


def _round_up(n, m):
    return ((n + m - 1) // m) * m


def tis_kernel(x_ref, w1_ref, b1_ref, w2_ref, b2_ref, w3_ref, b3_ref,
               fw1_ref, fb1_ref, fw2_ref, fb2_ref, o_ref):
    wdt = w1_ref.dtype                      # bf16 (production) or f32 (validation path)
    x = x_ref[...].astype(wdt)                                          # (BT, 256)

    # conv1: Toeplitz matmul + bias + ReLU -> (BT, 1152) = 3 aligned pool groups of 384.
    h1 = jnp.maximum(
        jnp.dot(x, w1_ref[...], preferred_element_type=jnp.float32) + b1_ref[...], 0.0)
    # maxpool (3,1): elementwise max of three 128-aligned groups (pure VALU, no rotates).
    m1 = jnp.maximum(jnp.maximum(h1[:, 0:G1], h1[:, G1:2 * G1]), h1[:, 2 * G1:3 * G1])

    # conv2 -> (BT, 768) = 3 aligned pool groups of 256.
    h2 = jnp.maximum(
        jnp.dot(m1.astype(wdt), w2_ref[...], preferred_element_type=jnp.float32)
        + b2_ref[...], 0.0)
    m2 = jnp.maximum(jnp.maximum(h2[:, 0:G2], h2[:, G2:2 * G2]), h2[:, 2 * G2:3 * G2])

    # conv3 -> (BT, 384) = 3 aligned pool groups of 128.
    h3 = jnp.maximum(
        jnp.dot(m2.astype(wdt), w3_ref[...], preferred_element_type=jnp.float32)
        + b3_ref[...], 0.0)
    # final maxpool (3,1): 3 rows -> 1 row; lanes 0..63 hold the flattened features.
    feat = jnp.maximum(jnp.maximum(h3[:, 0:G3], h3[:, G3:2 * G3]), h3[:, 2 * G3:3 * G3])

    # classifier: Linear(64, hidden) + ReLU + Dropout(identity, eval) + Linear(hidden, 2)
    h = jnp.maximum(
        jnp.dot(feat.astype(wdt), fw1_ref[...], preferred_element_type=jnp.float32)
        + fb1_ref[...], 0.0)
    o_ref[...] = (jnp.dot(h.astype(wdt), fw2_ref[...],
                          preferred_element_type=jnp.float32) + fb2_ref[...])


def tis_forward(x, kernel_params, block_b=256):
    """x: (B, 1, 60, 4) float32 (NCHW). Returns (B, 2) float32."""
    (w1t, b1r, w2t, b2r, w3t, b3r, fw1, fb1, fw2, fb2) = kernel_params
    B = x.shape[0]

    xs = x.reshape(B, H_IN * W_IN).astype(jnp.float32)        # lane = 4*h + w

    # Batch tile: always a multiple of 8; guarantee >=2 grid steps when possible so the
    # "parallel" grid axis can shard across both v7x TensorCores.
    BT = max(8, min(block_b, _round_up(B, 8)))
    BT = _round_up(BT, 8)
    if _round_up(B, BT) // BT < 2 and BT > 8:
        BT = _round_up((BT + 1) // 2, 8)
    B_pad = _round_up(B, BT)

    # Zero-pad: batch to a whole number of tiles, lanes 240 -> 256 (K lane alignment).
    xs = jnp.pad(xs, ((0, B_pad - B), (0, K_IN - H_IN * W_IN)))

    rep = lambda a: pl.BlockSpec(a.shape, lambda b: (0, 0))    # grid-invariant operand
    in_specs = [
        pl.BlockSpec((BT, K_IN), lambda b: (b, 0)),            # x batch tile
        rep(w1t), rep(b1r),
        rep(w2t), rep(b2r),
        rep(w3t), rep(b3r),
        rep(fw1), rep(fb1),
        rep(fw2), rep(fb2),
    ]
    out = pl.pallas_call(
        tis_kernel,
        out_shape=jax.ShapeDtypeStruct((B_pad, OUT_PAD), jnp.float32),
        grid=(B_pad // BT,),
        in_specs=in_specs,
        out_specs=pl.BlockSpec((BT, OUT_PAD), lambda b: (b, 0)),
        compiler_params=pltpu.CompilerParams(
            dimension_semantics=("parallel",),
            vmem_limit_bytes=32 * 1024 * 1024),
    )(xs, w1t, b1r, w2t, b2r, w3t, b3r, fw1, fb1, fw2, fb2)
    return out[:B, :2]


def make_params(key):
    """Deterministic parameters in PyTorch shapes."""
    ks = jax.random.split(key, 10)
    c1w = 0.1 * jax.random.normal(ks[0], (16, 1, 7, 4), jnp.float32)
    c1b = 0.1 * jax.random.normal(ks[1], (16,), jnp.float32)
    c2w = 0.1 * jax.random.normal(ks[2], (32, 16, 3, 1), jnp.float32)
    c2b = 0.1 * jax.random.normal(ks[3], (32,), jnp.float32)
    c3w = 0.1 * jax.random.normal(ks[4], (64, 32, 3, 1), jnp.float32)
    c3b = 0.1 * jax.random.normal(ks[5], (64,), jnp.float32)
    l1w = 0.1 * jax.random.normal(ks[6], (HIDDEN, 64), jnp.float32)
    l1b = 0.1 * jax.random.normal(ks[7], (HIDDEN,), jnp.float32)
    l2w = 0.1 * jax.random.normal(ks[8], (2, HIDDEN), jnp.float32)
    l2b = 0.1 * jax.random.normal(ks[9], (2,), jnp.float32)
    return (c1w, c1b, c2w, c2b, c3w, c3b, l1w, l1b, l2w, l2b)


def _pool_group_bias(b, reps, group_w):
    """Bias row replicated per output row inside each of the 3 pool-candidate groups."""
    f32 = jnp.float32
    per = jnp.concatenate([jnp.tile(b.astype(f32), reps),
                           jnp.zeros((group_w - reps * b.shape[0],), f32)])
    return jnp.tile(per, 3).reshape(1, 3 * group_w)


def params_for_kernel(p, dtype=jnp.bfloat16):
    """Expand PyTorch conv weights into pool-group-major block-Toeplitz matmul weights.

    Output column layout of layer k: column = g*Gk + (rows_per_group_stride)*j + c,
    where g in {0,1,2} is the max-pool candidate (conv row 3j+g).  Group widths Gk are
    multiples of 128; padded columns (and padded bias lanes) are zero, and the matching
    rows of the next layer's Toeplitz weight are zero, so padding never affects results.
    """
    c1w, c1b, c2w, c2b, c3w, c3b, l1w, l1b, l2w, l2b = p
    f32 = jnp.float32

    # conv1: (16,1,7,4) -> (28,16) block, w1[4*dh + w, c] = c1w[c,0,dh,w]
    w1 = jnp.transpose(c1w[:, 0], (1, 2, 0)).reshape(7 * W_IN, C1).astype(f32)
    w1t = jnp.zeros((K_IN, N1), f32)
    for g in range(3):
        for j in range(P1):
            r1 = 3 * j + g                                     # conv1 output row
            col = g * G1 + C1 * j
            w1t = w1t.at[W_IN * r1:W_IN * r1 + 7 * W_IN, col:col + C1].set(w1)

    # conv2: (32,16,3,1) -> w2[dh, cin, cout]; m1 lane layout is 16*p + cin.
    w2 = jnp.transpose(c2w[:, :, :, 0], (2, 1, 0)).astype(f32)          # (3, 16, 32)
    w2t = jnp.zeros((G1, N2), f32)
    for g in range(3):
        for j in range(P2):
            r2 = 3 * j + g                                     # conv2 output row (<=14)
            col = g * G2 + C2 * j
            for dh in range(3):
                row = C1 * (r2 + dh)
                w2t = w2t.at[row:row + C1, col:col + C2].set(w2[dh])

    # conv3: (64,32,3,1) -> w3[dh, cin, cout]; m2 lane layout is 32*q + cin.
    w3 = jnp.transpose(c3w[:, :, :, 0], (2, 1, 0)).astype(f32)          # (3, 32, 64)
    w3t = jnp.zeros((G2, N3), f32)
    for g in range(3):                                         # g == conv3 output row
        col = g * G3
        for dh in range(3):
            row = C2 * (g + dh)
            w3t = w3t.at[row:row + C2, col:col + C3].set(w3[dh])

    b1r = _pool_group_bias(c1b, P1, G1)                        # (1, 1152)
    b2r = _pool_group_bias(c2b, P2, G2)                        # (1, 768)
    b3r = _pool_group_bias(c3b, 1, G3)                         # (1, 384)

    fw1 = jnp.zeros((G3, HID_PAD), f32).at[:64, :HIDDEN].set(l1w.T.astype(f32))
    fb1 = jnp.zeros((1, HID_PAD), f32).at[0, :HIDDEN].set(l1b.astype(f32))
    fw2 = jnp.zeros((HID_PAD, OUT_PAD), f32).at[:HIDDEN, :2].set(l2w.T.astype(f32))
    fb2 = jnp.zeros((1, OUT_PAD), f32).at[0, :2].set(l2b.astype(f32))

    cast = lambda a: a.astype(dtype)
    # Weights in `dtype` (bf16 production / f32 validation); biases stay f32 (added
    # after the f32-accumulated dot).
    return (cast(w1t), b1r, cast(w2t), b2r, cast(w3t), b3r,
            cast(fw1), fb1, cast(fw2), fb2)


def reference_forward(x, p):
    """Pure-JAX f32 reference matching PyTorch semantics (eval mode)."""
    c1w, c1b, c2w, c2b, c3w, c3b, l1w, l1b, l2w, l2b = p
    dn = ('NCHW', 'OIHW', 'NCHW')

    def conv_relu_pool(a, w, b):
        a = jax.lax.conv_general_dilated(a, w, (1, 1), 'VALID', dimension_numbers=dn)
        a = a + b.reshape(1, -1, 1, 1)
        a = jnp.maximum(a, 0.0)
        return jax.lax.reduce_window(a, -jnp.inf, jax.lax.max,
                                     (1, 1, 3, 1), (1, 1, 3, 1), 'VALID')

    a = conv_relu_pool(x, c1w, c1b)
    a = conv_relu_pool(a, c2w, c2b)
    a = conv_relu_pool(a, c3w, c3b)
    flat = a.reshape(a.shape[0], -1)                        # (B, 64)
    h = jnp.maximum(flat @ l1w.T + l1b, 0.0)                # dropout = identity (eval)
    return h @ l2w.T + l2b


if __name__ == "__main__":
    key = jax.random.PRNGKey(0)
    pkey, xkey1, xkey2 = jax.random.split(key, 3)
    torch_params = make_params(pkey)

    params_f32 = params_for_kernel(torch_params, dtype=jnp.float32)    # tight validation
    params_bf16 = params_for_kernel(torch_params, dtype=jnp.bfloat16)  # production path

    # Primary check: small batch (B=2).
    x = jax.random.normal(xkey1, (2, 1, H_IN, W_IN), jnp.float32)       # NCHW
    ref = reference_forward(x, torch_params)

    out_f32 = jax.block_until_ready(tis_forward(x, params_f32))
    assert out_f32.shape == (2, 2), out_f32.shape
    if not bool(jnp.allclose(out_f32, ref, rtol=1e-4, atol=1e-4)):
        raise AssertionError(f"f32-path mismatch vs reference (B=2):\n{out_f32}\n{ref}")

    out_bf16 = jax.block_until_ready(tis_forward(x, params_bf16))
    assert out_bf16.shape == (2, 2), out_bf16.shape
    if not bool(jnp.allclose(out_bf16, ref, rtol=5e-2, atol=5e-2)):
        raise AssertionError(f"bf16-path mismatch vs reference (B=2):\n{out_bf16}\n{ref}")

    # Tail-block check: B not a multiple of the batch tile (multi-step parallel grid).
    x2 = jax.random.normal(xkey2, (13, 1, H_IN, W_IN), jnp.float32)
    ref2 = reference_forward(x2, torch_params)
    out2 = jax.block_until_ready(tis_forward(x2, params_bf16, block_b=8))
    assert out2.shape == (13, 2), out2.shape
    if not bool(jnp.allclose(out2, ref2, rtol=5e-2, atol=5e-2)):
        raise AssertionError(f"bf16-path mismatch vs reference (B=13):\n{out2}\n{ref2}")

    print("KERNEL_OK")
</pallas_src>

<mosaic_0001>
module attributes {stable_mosaic.version = 11 : i64} {
  func.func @tis_kernel(%arg0: i32, %arg1: memref<8x256xf32, #tpu.memory_space<vmem>>, %arg2: memref<256x1152xf32, #tpu.memory_space<vmem>>, %arg3: memref<1x1152xf32, #tpu.memory_space<vmem>>, %arg4: memref<384x768xf32, #tpu.memory_space<vmem>>, %arg5: memref<1x768xf32, #tpu.memory_space<vmem>>, %arg6: memref<256x384xf32, #tpu.memory_space<vmem>>, %arg7: memref<1x384xf32, #tpu.memory_space<vmem>>, %arg8: memref<128x128xf32, #tpu.memory_space<vmem>>, %arg9: memref<1x128xf32, #tpu.memory_space<vmem>>, %arg10: memref<128x128xf32, #tpu.memory_space<vmem>>, %arg11: memref<1x128xf32, #tpu.memory_space<vmem>>, %arg12: memref<8x128xf32, #tpu.memory_space<vmem>>) attributes {dimension_semantics = [#tpu.dimension_semantics<parallel>], iteration_bounds = array<i64: 1>, scalar_prefetch = 0 : i64, scratch_operands = 0 : i64, tpu.core_type = #tpu.core_type<tc>, window_params = [{transform_indices = @transform_0, window_bounds = array<i64: 8, 256>}, {pipeline_mode = #tpu.pipeline_mode<synchronous>, transform_indices = @transform_1, window_bounds = array<i64: 256, 1152>}, {pipeline_mode = #tpu.pipeline_mode<synchronous>, transform_indices = @transform_2, window_bounds = array<i64: 1, 1152>}, {pipeline_mode = #tpu.pipeline_mode<synchronous>, transform_indices = @transform_3, window_bounds = array<i64: 384, 768>}, {pipeline_mode = #tpu.pipeline_mode<synchronous>, transform_indices = @transform_4, window_bounds = array<i64: 1, 768>}, {pipeline_mode = #tpu.pipeline_mode<synchronous>, transform_indices = @transform_5, window_bounds = array<i64: 256, 384>}, {pipeline_mode = #tpu.pipeline_mode<synchronous>, transform_indices = @transform_6, window_bounds = array<i64: 1, 384>}, {pipeline_mode = #tpu.pipeline_mode<synchronous>, transform_indices = @transform_7, window_bounds = array<i64: 128, 128>}, {pipeline_mode = #tpu.pipeline_mode<synchronous>, transform_indices = @transform_8, window_bounds = array<i64: 1, 128>}, {pipeline_mode = #tpu.pipeline_mode<synchronous>, transform_indices = @transform_9, window_bounds = array<i64: 128, 128>}, {pipeline_mode = #tpu.pipeline_mode<synchronous>, transform_indices = @transform_10, window_bounds = array<i64: 1, 128>}, {transform_indices = @transform_11, window_bounds = array<i64: 8, 128>}]} {
    %c0 = arith.constant 0 : index
    %c0_0 = arith.constant 0 : index
    %0 = vector.load %arg1[%c0, %c0_0] : memref<8x256xf32, #tpu.memory_space<vmem>>, vector<8x256xf32>
    %c0_1 = arith.constant 0 : index
    %c0_2 = arith.constant 0 : index
    %1 = vector.load %arg2[%c0_1, %c0_2] : memref<256x1152xf32, #tpu.memory_space<vmem>>, vector<256x1152xf32>
    %cst = arith.constant dense<0.000000e+00> : vector<8x1152xf32>
    %2 = tpu.matmul %0, %1, %cst {dimension_numbers = #tpu.dot_dimension_numbers<[1], [0], [0], [1], [0, 0, 1, 1], [], []>} : vector<8x256xf32>, vector<256x1152xf32>, vector<8x1152xf32> -> vector<8x1152xf32>
    %c0_3 = arith.constant 0 : index
    %c0_4 = arith.constant 0 : index
    %3 = vector.load %arg3[%c0_3, %c0_4] : memref<1x1152xf32, #tpu.memory_space<vmem>>, vector<1x1152xf32>
    %4 = vector.broadcast %3 : vector<1x1152xf32> to vector<8x1152xf32>
    %5 = arith.addf %2, %4 : vector<8x1152xf32>
    %cst_5 = arith.constant 0.000000e+00 : f32
    %6 = vector.broadcast %cst_5 : f32 to vector<8x1152xf32>
    %7 = arith.maximumf %5, %6 : vector<8x1152xf32>
    %8 = vector.extract_strided_slice %7 {offsets = [0, 0], sizes = [8, 384], strides = [1, 1]} : vector<8x1152xf32> to vector<8x384xf32>
    %9 = vector.extract_strided_slice %7 {offsets = [0, 384], sizes = [8, 384], strides = [1, 1]} : vector<8x1152xf32> to vector<8x384xf32>
    %10 = arith.maximumf %8, %9 : vector<8x384xf32>
    %11 = vector.extract_strided_slice %7 {offsets = [0, 768], sizes = [8, 384], strides = [1, 1]} : vector<8x1152xf32> to vector<8x384xf32>
    %12 = arith.maximumf %10, %11 : vector<8x384xf32>
    %c0_6 = arith.constant 0 : index
    %c0_7 = arith.constant 0 : index
    %13 = vector.load %arg4[%c0_6, %c0_7] : memref<384x768xf32, #tpu.memory_space<vmem>>, vector<384x768xf32>
    %cst_8 = arith.constant dense<0.000000e+00> : vector<8x768xf32>
    %14 = tpu.matmul %12, %13, %cst_8 {dimension_numbers = #tpu.dot_dimension_numbers<[1], [0], [0], [1], [0, 0, 1, 1], [], []>} : vector<8x384xf32>, vector<384x768xf32>, vector<8x768xf32> -> vector<8x768xf32>
    %c0_9 = arith.constant 0 : index
    %c0_10 = arith.constant 0 : index
    %15 = vector.load %arg5[%c0_9, %c0_10] : memref<1x768xf32, #tpu.memory_space<vmem>>, vector<1x768xf32>
    %16 = vector.broadcast %15 : vector<1x768xf32> to vector<8x768xf32>
    %17 = arith.addf %14, %16 : vector<8x768xf32>
    %cst_11 = arith.constant 0.000000e+00 : f32
    %18 = vector.broadcast %cst_11 : f32 to vector<8x768xf32>
    %19 = arith.maximumf %17, %18 : vector<8x768xf32>
    %20 = vector.extract_strided_slice %19 {offsets = [0, 0], sizes = [8, 256], strides = [1, 1]} : vector<8x768xf32> to vector<8x256xf32>
    %21 = vector.extract_strided_slice %19 {offsets = [0, 256], sizes = [8, 256], strides = [1, 1]} : vector<8x768xf32> to vector<8x256xf32>
    %22 = arith.maximumf %20, %21 : vector<8x256xf32>
    %23 = vector.extract_strided_slice %19 {offsets = [0, 512], sizes = [8, 256], strides = [1, 1]} : vector<8x768xf32> to vector<8x256xf32>
    %24 = arith.maximumf %22, %23 : vector<8x256xf32>
    %c0_12 = arith.constant 0 : index
    %c0_13 = arith.constant 0 : index
    %25 = vector.load %arg6[%c0_12, %c0_13] : memref<256x384xf32, #tpu.memory_space<vmem>>, vector<256x384xf32>
    %cst_14 = arith.constant dense<0.000000e+00> : vector<8x384xf32>
    %26 = tpu.matmul %24, %25, %cst_14 {dimension_numbers = #tpu.dot_dimension_numbers<[1], [0], [0], [1], [0, 0, 1, 1], [], []>} : vector<8x256xf32>, vector<256x384xf32>, vector<8x384xf32> -> vector<8x384xf32>
    %c0_15 = arith.constant 0 : index
    %c0_16 = arith.constant 0 : index
    %27 = vector.load %arg7[%c0_15, %c0_16] : memref<1x384xf32, #tpu.memory_space<vmem>>, vector<1x384xf32>
    %28 = vector.broadcast %27 : vector<1x384xf32> to vector<8x384xf32>
    %29 = arith.addf %26, %28 : vector<8x384xf32>
    %cst_17 = arith.constant 0.000000e+00 : f32
    %30 = vector.broadcast %cst_17 : f32 to vector<8x384xf32>
    %31 = arith.maximumf %29, %30 : vector<8x384xf32>
    %32 = vector.extract_strided_slice %31 {offsets = [0, 0], sizes = [8, 128], strides = [1, 1]} : vector<8x384xf32> to vector<8x128xf32>
    %33 = vector.extract_strided_slice %31 {offsets = [0, 128], sizes = [8, 128], strides = [1, 1]} : vector<8x384xf32> to vector<8x128xf32>
    %34 = arith.maximumf %32, %33 : vector<8x128xf32>
    %35 = vector.extract_strided_slice %31 {offsets = [0, 256], sizes = [8, 128], strides = [1, 1]} : vector<8x384xf32> to vector<8x128xf32>
    %36 = arith.maximumf %34, %35 : vector<8x128xf32>
    %c0_18 = arith.constant 0 : index
    %c0_19 = arith.constant 0 : index
    %37 = vector.load %arg8[%c0_18, %c0_19] : memref<128x128xf32, #tpu.memory_space<vmem>>, vector<128x128xf32>
    %cst_20 = arith.constant dense<0.000000e+00> : vector<8x128xf32>
    %38 = tpu.matmul %36, %37, %cst_20 {dimension_numbers = #tpu.dot_dimension_numbers<[1], [0], [0], [1], [0, 0, 1, 1], [], []>} : vector<8x128xf32>, vector<128x128xf32>, vector<8x128xf32> -> vector<8x128xf32>
    %c0_21 = arith.constant 0 : index
    %c0_22 = arith.constant 0 : index
    %39 = vector.load %arg9[%c0_21, %c0_22] : memref<1x128xf32, #tpu.memory_space<vmem>>, vector<1x128xf32>
    %40 = vector.broadcast %39 : vector<1x128xf32> to vector<8x128xf32>
    %41 = arith.addf %38, %40 : vector<8x128xf32>
    %cst_23 = arith.constant 0.000000e+00 : f32
    %42 = vector.broadcast %cst_23 : f32 to vector<8x128xf32>
    %43 = arith.maximumf %41, %42 : vector<8x128xf32>
    %c0_24 = arith.constant 0 : index
    %c0_25 = arith.constant 0 : index
    %44 = vector.load %arg10[%c0_24, %c0_25] : memref<128x128xf32, #tpu.memory_space<vmem>>, vector<128x128xf32>
    %cst_26 = arith.constant dense<0.000000e+00> : vector<8x128xf32>
    %45 = tpu.matmul %43, %44, %cst_26 {dimension_numbers = #tpu.dot_dimension_numbers<[1], [0], [0], [1], [0, 0, 1, 1], [], []>} : vector<8x128xf32>, vector<128x128xf32>, vector<8x128xf32> -> vector<8x128xf32>
    %c0_27 = arith.constant 0 : index
    %c0_28 = arith.constant 0 : index
    %46 = vector.load %arg11[%c0_27, %c0_28] : memref<1x128xf32, #tpu.memory_space<vmem>>, vector<1x128xf32>
    %47 = vector.broadcast %46 : vector<1x128xf32> to vector<8x128xf32>
    %48 = arith.addf %45, %47 : vector<8x128xf32>
    %c0_29 = arith.constant 0 : index
    %c0_30 = arith.constant 0 : index
    %49 = vector.load %arg12[%c0_29, %c0_30] : memref<8x128xf32, #tpu.memory_space<vmem>>, vector<8x128xf32>
    tpu.vector_store %arg12[%c0_29, %c0_30], %48 {strides = array<i32>} : memref<8x128xf32, #tpu.memory_space<vmem>>, vector<8x128xf32>,
    return
  }
  func.func @transform_0(%arg0: i32) -> (i32, i32) {
    %c0_i32 = arith.constant 0 : i32
    %c0_i32_0 = arith.constant 0 : i32
    return %arg0, %c0_i32 : i32, i32
  }
  func.func @transform_1(%arg0: i32) -> (i32, i32) {
    %c0_i32 = arith.constant 0 : i32
    %c0_i32_0 = arith.constant 0 : i32
    %c0_i32_1 = arith.constant 0 : i32
    return %c0_i32, %c0_i32_0 : i32, i32
  }
  func.func @transform_2(%arg0: i32) -> (i32, i32) {
    %c0_i32 = arith.constant 0 : i32
    %c0_i32_0 = arith.constant 0 : i32
    %c0_i32_1 = arith.constant 0 : i32
    return %c0_i32, %c0_i32_0 : i32, i32
  }
  func.func @transform_3(%arg0: i32) -> (i32, i32) {
    %c0_i32 = arith.constant 0 : i32
    %c0_i32_0 = arith.constant 0 : i32
    %c0_i32_1 = arith.constant 0 : i32
    return %c0_i32, %c0_i32_0 : i32, i32
  }
  func.func @transform_4(%arg0: i32) -> (i32, i32) {
    %c0_i32 = arith.constant 0 : i32
    %c0_i32_0 = arith.constant 0 : i32
    %c0_i32_1 = arith.constant 0 : i32
    return %c0_i32, %c0_i32_0 : i32, i32
  }
  func.func @transform_5(%arg0: i32) -> (i32, i32) {
    %c0_i32 = arith.constant 0 : i32
    %c0_i32_0 = arith.constant 0 : i32
    %c0_i32_1 = arith.constant 0 : i32
    return %c0_i32, %c0_i32_0 : i32, i32
  }
  func.func @transform_6(%arg0: i32) -> (i32, i32) {
    %c0_i32 = arith.constant 0 : i32
    %c0_i32_0 = arith.constant 0 : i32
    %c0_i32_1 = arith.constant 0 : i32
    return %c0_i32, %c0_i32_0 : i32, i32
  }
  func.func @transform_7(%arg0: i32) -> (i32, i32) {
    %c0_i32 = arith.constant 0 : i32
    %c0_i32_0 = arith.constant 0 : i32
    %c0_i32_1 = arith.constant 0 : i32
    return %c0_i32, %c0_i32_0 : i32, i32
  }
  func.func @transform_8(%arg0: i32) -> (i32, i32) {
    %c0_i32 = arith.constant 0 : i32
    %c0_i32_0 = arith.constant 0 : i32
    %c0_i32_1 = arith.constant 0 : i32
    return %c0_i32, %c0_i32_0 : i32, i32
  }
  func.func @transform_9(%arg0: i32) -> (i32, i32) {
    %c0_i32 = arith.constant 0 : i32
    %c0_i32_0 = arith.constant 0 : i32
    %c0_i32_1 = arith.constant 0 : i32
    return %c0_i32, %c0_i32_0 : i32, i32
  }
  func.func @transform_10(%arg0: i32) -> (i32, i32) {
    %c0_i32 = arith.constant 0 : i32
    %c0_i32_0 = arith.constant 0 : i32
    %c0_i32_1 = arith.constant 0 : i32
    return %c0_i32, %c0_i32_0 : i32, i32
  }
  func.func @transform_11(%arg0: i32) -> (i32, i32) {
    %c0_i32 = arith.constant 0 : i32
    %c0_i32_0 = arith.constant 0 : i32
    return %arg0, %c0_i32 : i32, i32
  }
}

</mosaic_0001>

<llo_original>
// kernel: tpu_custom_call.1
$region0: #{tpu_custom_call.1}
  #allocation0 [shape = 'u32[]', space=smem, size = 0x4, offset = 0x4, fixed_abs, tag = 'smem constant byte address 0x4 - core index']
  #allocation1 [shape = 'u32[144,128]{1,0:T(1,128)}', space=vmem, size = 0x12000, scoped, tag = 'internal scratch']
  %s0 = inlined_call_operand.hbm [shape: f32[8,256], index: 0, kind: input, shape index: {}]
  %s1 = inlined_call_operand.hbm [shape: f32[256,1152], index: 1, kind: input, shape index: {}]
  %s2 = inlined_call_operand.hbm [shape: f32[1,1152], index: 2, kind: input, shape index: {}]
  %s3 = inlined_call_operand.hbm [shape: f32[384,768], index: 3, kind: input, shape index: {}]
  %s4 = inlined_call_operand.hbm [shape: f32[1,768], index: 4, kind: input, shape index: {}]
  %s5 = inlined_call_operand.hbm [shape: f32[256,384], index: 5, kind: input, shape index: {}]
  %s6 = inlined_call_operand.hbm [shape: f32[1,384], index: 6, kind: input, shape index: {}]
  %s7 = inlined_call_operand.hbm [shape: f32[128,128], index: 7, kind: input, shape index: {}]
  %s8 = inlined_call_operand.hbm [shape: f32[1,128], index: 8, kind: input, shape index: {}]
  %s9 = inlined_call_operand.hbm [shape: f32[128,128], index: 9, kind: input, shape index: {}]
  %s10 = inlined_call_operand.hbm [shape: f32[1,128], index: 10, kind: input, shape index: {}]
  %s11 = inlined_call_operand.hbm [shape: f32[8,128], index: 11, kind: output, shape index: {}]
  %s12 = sld [smem:[#allocation0]]
  $region98: #{tpu_custom_call.1} parent=0
    _
  %s14 = ssub.s32 1, %s12
  %s15 = scalar_select 0, %s14, %s12
  $region1: #{tpu_custom_call.1} parent=0
    #allocation2 [shape = 'u8[8192]{0}', space=vmem, size = 0x2000, scoped, tag = 'input window, operand 0, single buffered']
    #allocation3 [shape = 's32[1]{0}', space=sflag, size = 0x4, scoped, tag = 'scoped memory for tpu_custom_call.1']
    #allocation4 [shape = 's32[1]{0}', space=sflag, size = 0x4, scoped, tag = 'scoped memory for tpu_custom_call.1']
    #allocation5 [shape = 'u8[1179648]{0}', space=vmem, size = 0x120000, scoped, tag = 'input window, operand 1, single buffered']
    #allocation6 [shape = 's32[1]{0}', space=sflag, size = 0x4, scoped, tag = 'scoped memory for tpu_custom_call.1']
    #allocation7 [shape = 'u8[4608]{0}', space=vmem, size = 0x1400, scoped, tag = 'input window, operand 2, single buffered']
    #allocation8 [shape = 'u8[1179648]{0}', space=vmem, size = 0x120000, scoped, tag = 'input window, operand 3, single buffered']
    #allocation9 [shape = 's32[1]{0}', space=sflag, size = 0x4, scoped, tag = 'scoped memory for tpu_custom_call.1']
    #allocation10 [shape = 'u8[3072]{0}', space=vmem, size = 0xc00, scoped, tag = 'input window, operand 4, single buffered']
    #allocation11 [shape = 'u8[393216]{0}', space=vmem, size = 0x60000, scoped, tag = 'input window, operand 5, single buffered']
    #allocation12 [shape = 's32[1]{0}', space=sflag, size = 0x4, scoped, tag = 'scoped memory for tpu_custom_call.1']
    #allocation13 [shape = 'u8[1536]{0}', space=vmem, size = 0x800, scoped, tag = 'input window, operand 6, single buffered']
    #allocation14 [shape = 'u8[65536]{0}', space=vmem, size = 0x10000, scoped, tag = 'input window, operand 7, single buffered']
    #allocation15 [shape = 's32[1]{0}', space=sflag, size = 0x4, scoped, tag = 'scoped memory for tpu_custom_call.1']
    #allocation16 [shape = 'u8[512]{0}', space=vmem, size = 0x400, scoped, tag = 'input window, operand 8, single buffered']
    #allocation17 [shape = 'u8[65536]{0}', space=vmem, size = 0x10000, scoped, tag = 'input window, operand 9, single buffered']
    #allocation18 [shape = 's32[1]{0}', space=sflag, size = 0x4, scoped, tag = 'scoped memory for tpu_custom_call.1']
    #allocation19 [shape = 'u8[512]{0}', space=vmem, size = 0x400, scoped, tag = 'input window, operand 10, single buffered']
    #allocation20 [shape = 'u8[4096]{0}', space=vmem, size = 0x1000, scoped, tag = 'output window, operand 0, single buffered']
    %16 = vsyncpa [#allocation3], 0
    %17 = vsyncpa [#allocation6], 0
    %18 = vsyncpa [#allocation9], 0
    %19 = vsyncpa [#allocation12], 0
    %20 = vsyncpa [#allocation15], 0
    %21 = vsyncpa [#allocation18], 0
    %22 = vsyncpa [#allocation4], 0
    // Predicated region
    $region2: #{tpu_custom_call.1} parent=1 // pred_check
      _
    $region3: #{tpu_custom_call.1} parent=1 // pred_check_branch
      %24 = sbr.rel (0) target = $region5
    $region4: #{tpu_custom_call.1} parent=1 // pred_region
      %s26 = ssub.s32 256, 256
      %27 = vsyncadd [#allocation3], %s26
      %s29 = sshll.u32 [#allocation2], 4
      %s30 = int_to_ptr.vmem [resolvable:$true] %s29
      %32 = dma.hbm_to_vmem [thread:$0]  %s0, 256, %s30, [#allocation3]
    $region5: #{tpu_custom_call.1} parent=1 // pred_fallthru
      _
    // Predicated region
    $region6: #{tpu_custom_call.1} parent=1 // pred_check
      _
    $region7: #{tpu_custom_call.1} parent=1 // pred_check_branch
      %34 = sbr.rel (0) target = $region9
    $region8: #{tpu_custom_call.1} parent=1 // pred_region
      %s36 = ssub.s32 36864, 36864
      %37 = vsyncadd [#allocation6], %s36
      %s38 = sshll.u32 [#allocation5], 4
      %s39 = int_to_ptr.vmem [resolvable:$true] %s38
      %44 = dma.hbm_to_vmem [thread:$0]  %s1, 36864, %s39, [#allocation6], 1152, 1152, 72
    $region9: #{tpu_custom_call.1} parent=1 // pred_fallthru
      _
    // Predicated region
    $region10: #{tpu_custom_call.1} parent=1 // pred_check
      _
    $region11: #{tpu_custom_call.1} parent=1 // pred_check_branch
      %46 = sbr.rel (0) target = $region13
    $region12: #{tpu_custom_call.1} parent=1 // pred_region
      %s48 = ssub.s32 144, 144
      %49 = vsyncadd [#allocation6], %s48
      %s51 = sshll.u32 [#allocation7], 4
      %s52 = int_to_ptr.vmem [resolvable:$true] %s51
      %54 = dma.hbm_to_vmem [thread:$0]  %s2, 144, %s52, [#allocation6]
    $region13: #{tpu_custom_call.1} parent=1 // pred_fallthru
      _
    // Predicated region
    $region14: #{tpu_custom_call.1} parent=1 // pred_check
      _
    $region15: #{tpu_custom_call.1} parent=1 // pred_check_branch
      %56 = sbr.rel (0) target = $region17
    $region16: #{tpu_custom_call.1} parent=1 // pred_region
      %s58 = ssub.s32 36864, 36864
      %59 = vsyncadd [#allocation9], %s58
      %s60 = sshll.u32 [#allocation8], 4
      %s61 = int_to_ptr.vmem [resolvable:$true] %s60
      %66 = dma.hbm_to_vmem [thread:$0]  %s3, 36864, %s61, [#allocation9], 768, 768, 48
    $region17: #{tpu_custom_call.1} parent=1 // pred_fallthru
      _
    // Predicated region
    $region18: #{tpu_custom_call.1} parent=1 // pred_check
      _
    $region19: #{tpu_custom_call.1} parent=1 // pred_check_branch
      %68 = sbr.rel (0) target = $region21
    $region20: #{tpu_custom_call.1} parent=1 // pred_region
      %s70 = ssub.s32 96, 96
      %71 = vsyncadd [#allocation9], %s70
      %s73 = sshll.u32 [#allocation10], 4
      %s74 = int_to_ptr.vmem [resolvable:$true] %s73
      %76 = dma.hbm_to_vmem [thread:$0]  %s4, 96, %s74, [#allocation9]
    $region21: #{tpu_custom_call.1} parent=1 // pred_fallthru
      _
    // Predicated region
    $region22: #{tpu_custom_call.1} parent=1 // pred_check
      _
    $region23: #{tpu_custom_call.1} parent=1 // pred_check_branch
      %78 = sbr.rel (0) target = $region25
    $region24: #{tpu_custom_call.1} parent=1 // pred_region
      %s80 = ssub.s32 12288, 12288
      %81 = vsyncadd [#allocation12], %s80
      %s82 = sshll.u32 [#allocation11], 4
      %s83 = int_to_ptr.vmem [resolvable:$true] %s82
      %88 = dma.hbm_to_vmem [thread:$0]  %s5, 12288, %s83, [#allocation12], 384, 384, 24
    $region25: #{tpu_custom_call.1} parent=1 // pred_fallthru
      _
    // Predicated region
    $region26: #{tpu_custom_call.1} parent=1 // pred_check
      _
    $region27: #{tpu_custom_call.1} parent=1 // pred_check_branch
      %90 = sbr.rel (0) target = $region29
    $region28: #{tpu_custom_call.1} parent=1 // pred_region
      %s92 = ssub.s32 48, 48
      %93 = vsyncadd [#allocation12], %s92
      %s95 = sshll.u32 [#allocation13], 4
      %s96 = int_to_ptr.vmem [resolvable:$true] %s95
      %98 = dma.hbm_to_vmem [thread:$0]  %s6, 48, %s96, [#allocation12]
    $region29: #{tpu_custom_call.1} parent=1 // pred_fallthru
      _
    // Predicated region
    $region30: #{tpu_custom_call.1} parent=1 // pred_check
      _
    $region31: #{tpu_custom_call.1} parent=1 // pred_check_branch
      %100 = sbr.rel (0) target = $region33
    $region32: #{tpu_custom_call.1} parent=1 // pred_region
      %s102 = ssub.s32 2048, 2048
      %103 = vsyncadd [#allocation15], %s102
      %s104 = sshll.u32 [#allocation14], 4
      %s105 = int_to_ptr.vmem [resolvable:$true] %s104
      %110 = dma.hbm_to_vmem [thread:$0]  %s7, 2048, %s105, [#allocation15], 128, 128, 8
    $region33: #{tpu_custom_call.1} parent=1 // pred_fallthru
      _
    // Predicated region
    $region34: #{tpu_custom_call.1} parent=1 // pred_check
      _
    $region35: #{tpu_custom_call.1} parent=1 // pred_check_branch
      %112 = sbr.rel (0) target = $region37
    $region36: #{tpu_custom_call.1} parent=1 // pred_region
      %s114 = ssub.s32 16, 16
      %115 = vsyncadd [#allocation15], %s114
      %s117 = sshll.u32 [#allocation16], 4
      %s118 = int_to_ptr.vmem [resolvable:$true] %s117
      %120 = dma.hbm_to_vmem [thread:$0]  %s8, 16, %s118, [#allocation15]
    $region37: #{tpu_custom_call.1} parent=1 // pred_fallthru
      _
    // Predicated region
    $region38: #{tpu_custom_call.1} parent=1 // pred_check
      _
    $region39: #{tpu_custom_call.1} parent=1 // pred_check_branch
      %122 = sbr.rel (0) target = $region41
    $region40: #{tpu_custom_call.1} parent=1 // pred_region
      %s124 = ssub.s32 2048, 2048
      %125 = vsyncadd [#allocation18], %s124
      %s126 = sshll.u32 [#allocation17], 4
      %s127 = int_to_ptr.vmem [resolvable:$true] %s126
      %132 = dma.hbm_to_vmem [thread:$0]  %s9, 2048, %s127, [#allocation18], 128, 128, 8
    $region41: #{tpu_custom_call.1} parent=1 // pred_fallthru
      _
    // Predicated region
    $region42: #{tpu_custom_call.1} parent=1 // pred_check
      _
    $region43: #{tpu_custom_call.1} parent=1 // pred_check_branch
      %134 = sbr.rel (0) target = $region45
    $region44: #{tpu_custom_call.1} parent=1 // pred_region
      %s136 = ssub.s32 16, 16
      %137 = vsyncadd [#allocation18], %s136
      %s139 = sshll.u32 [#allocation19], 4
      %s140 = int_to_ptr.vmem [resolvable:$true] %s139
      %142 = dma.hbm_to_vmem [thread:$0]  %s10, 16, %s140, [#allocation18]
    $region45: #{tpu_custom_call.1} parent=1 // pred_fallthru
      _
    // Predicated region
    $region46: #{tpu_custom_call.1} parent=1 // pred_check
      _
    $region47: #{tpu_custom_call.1} parent=1 // pred_check_branch
      %144 = sbr.rel (0) target = $region49
    $region48: #{tpu_custom_call.1} parent=1 // pred_region
      %145 = dma.done [#allocation3], 256
    $region49: #{tpu_custom_call.1} parent=1 // pred_fallthru
      _
    // Predicated region
    $region50: #{tpu_custom_call.1} parent=1 // pred_check
      _
    $region51: #{tpu_custom_call.1} parent=1 // pred_check_branch
      %147 = sbr.rel (0) target = $region53
    $region52: #{tpu_custom_call.1} parent=1 // pred_region
      %148 = dma.done [#allocation6], 36864
    $region53: #{tpu_custom_call.1} parent=1 // pred_fallthru
      _
    // Predicated region
    $region54: #{tpu_custom_call.1} parent=1 // pred_check
      _
    $region55: #{tpu_custom_call.1} parent=1 // pred_check_branch
      %150 = sbr.rel (0) target = $region57
    $region56: #{tpu_custom_call.1} parent=1 // pred_region
      %151 = dma.done [#allocation6], 144
    $region57: #{tpu_custom_call.1} parent=1 // pred_fallthru
      _
    // Predicated region
    $region58: #{tpu_custom_call.1} parent=1 // pred_check
      _
    $region59: #{tpu_custom_call.1} parent=1 // pred_check_branch
      %153 = sbr.rel (0) target = $region61
    $region60: #{tpu_custom_call.1} parent=1 // pred_region
      %154 = dma.done [#allocation9], 36864
    $region61: #{tpu_custom_call.1} parent=1 // pred_fallthru
      _
    // Predicated region
    $region62: #{tpu_custom_call.1} parent=1 // pred_check
      _
    $region63: #{tpu_custom_call.1} parent=1 // pred_check_branch
      %156 = sbr.rel (0) target = $region65
    $region64: #{tpu_custom_call.1} parent=1 // pred_region
      %157 = dma.done [#allocation9], 96
    $region65: #{tpu_custom_call.1} parent=1 // pred_fallthru
      _
    // Predicated region
    $region66: #{tpu_custom_call.1} parent=1 // pred_check
      _
    $region67: #{tpu_custom_call.1} parent=1 // pred_check_branch
      %159 = sbr.rel (0) target = $region69
    $region68: #{tpu_custom_call.1} parent=1 // pred_region
      %160 = dma.done [#allocation12], 12288
    $region69: #{tpu_custom_call.1} parent=1 // pred_fallthru
      _
    // Predicated region
    $region70: #{tpu_custom_call.1} parent=1 // pred_check
      _
    $region71: #{tpu_custom_call.1} parent=1 // pred_check_branch
      %162 = sbr.rel (0) target = $region73
    $region72: #{tpu_custom_call.1} parent=1 // pred_region
      %163 = dma.done [#allocation12], 48
    $region73: #{tpu_custom_call.1} parent=1 // pred_fallthru
      _
    // Predicated region
    $region74: #{tpu_custom_call.1} parent=1 // pred_check
      _
    $region75: #{tpu_custom_call.1} parent=1 // pred_check_branch
      %165 = sbr.rel (0) target = $region77
    $region76: #{tpu_custom_call.1} parent=1 // pred_region
      %166 = dma.done [#allocation15], 2048
    $region77: #{tpu_custom_call.1} parent=1 // pred_fallthru
      _
    // Predicated region
    $region78: #{tpu_custom_call.1} parent=1 // pred_check
      _
    $region79: #{tpu_custom_call.1} parent=1 // pred_check_branch
      %168 = sbr.rel (0) target = $region81
    $region80: #{tpu_custom_call.1} parent=1 // pred_region
      %169 = dma.done [#allocation15], 16
    $region81: #{tpu_custom_call.1} parent=1 // pred_fallthru
      _
    // Predicated region
    $region82: #{tpu_custom_call.1} parent=1 // pred_check
      _
    $region83: #{tpu_custom_call.1} parent=1 // pred_check_branch
      %171 = sbr.rel (0) target = $region85
    $region84: #{tpu_custom_call.1} parent=1 // pred_region
      %172 = dma.done [#allocation18], 2048
    $region85: #{tpu_custom_call.1} parent=1 // pred_fallthru
      _
    // Predicated region
    $region86: #{tpu_custom_call.1} parent=1 // pred_check
      _
    $region87: #{tpu_custom_call.1} parent=1 // pred_check_branch
      %174 = sbr.rel (0) target = $region89
    $region88: #{tpu_custom_call.1} parent=1 // pred_region
      %175 = dma.done [#allocation18], 16
    $region89: #{tpu_custom_call.1} parent=1 // pred_fallthru
      _
    %v176 = vld [vmem:[#allocation2] sm:$0xff]
    %v177 = vld [vmem:[#allocation2 + $0x8] sm:$0xff]
    %v178 = vld [vmem:[#allocation5] sm:$0xff]
    %v179 = vld [vmem:[#allocation5 + $0x8] sm:$0xff]
    %v180 = vld [vmem:[#allocation5 + $0x10] sm:$0xff]
    %v181 = vld [vmem:[#allocation5 + $0x18] sm:$0xff]
    %v182 = vld [vmem:[#allocation5 + $0x20] sm:$0xff]
    %v183 = vld [vmem:[#allocation5 + $0x28] sm:$0xff]
    %v184 = vld [vmem:[#allocation5 + $0x30] sm:$0xff]
    %v185 = vld [vmem:[#allocation5 + $0x38] sm:$0xff]
    %v186 = vld [vmem:[#allocation5 + $0x40] sm:$0xff]
    %v187 = vld [vmem:[#allocation5 + $0x48] sm:$0xff]
    %v188 = vld [vmem:[#allocation5 + $0x50] sm:$0xff]
    %v189 = vld [vmem:[#allocation5 + $0x58] sm:$0xff]
    %v190 = vld [vmem:[#allocation5 + $0x60] sm:$0xff]
    %v191 = vld [vmem:[#allocation5 + $0x68] sm:$0xff]
    %v192 = vld [vmem:[#allocation5 + $0x70] sm:$0xff]
    %v193 = vld [vmem:[#allocation5 + $0x78] sm:$0xff]
    %v194 = vld [vmem:[#allocation5 + $0x80] sm:$0xff]
    %v195 = vld [vmem:[#allocation5 + $0x88] sm:$0xff]
    %v196 = vld [vmem:[#allocation5 + $0x90] sm:$0xff]
    %v197 = vld [vmem:[#allocation5 + $0x98] sm:$0xff]
    %v198 = vld [vmem:[#allocation5 + $0xa0] sm:$0xff]
    %v199 = vld [vmem:[#allocation5 + $0xa8] sm:$0xff]
    %v200 = vld [vmem:[#allocation5 + $0xb0] sm:$0xff]
    %v201 = vld [vmem:[#allocation5 + $0xb8] sm:$0xff]
    %v202 = vld [vmem:[#allocation5 + $0xc0] sm:$0xff]
    %v203 = vld [vmem:[#allocation5 + $0xc8] sm:$0xff]
    %v204 = vld [vmem:[#allocation5 + $0xd0] sm:$0xff]
    %v205 = vld [vmem:[#allocation5 + $0xd8] sm:$0xff]
    %v206 = vld [vmem:[#allocation5 + $0xe0] sm:$0xff]
    %v207 = vld [vmem:[#allocation5 + $0xe8] sm:$0xff]
    %v208 = vld [vmem:[#allocation5 + $0xf0] sm:$0xff]
    %v209 = vld [vmem:[#allocation5 + $0xf8] sm:$0xff]
    %v210 = vld [vmem:[#allocation5 + $0x100] sm:$0xff]
    %v211 = vld [vmem:[#allocation5 + $0x108] sm:$0xff]
    %v212 = vld [vmem:[#allocation5 + $0x110] sm:$0xff]
    %v213 = vld [vmem:[#allocation5 + $0x118] sm:$0xff]
    %v214 = vld [vmem:[#allocation5 + $0x120] sm:$0xff]
    %v215 = vld [vmem:[#allocation5 + $0x128] sm:$0xff]
    %v216 = vld [vmem:[#allocation5 + $0x130] sm:$0xff]
    %v217 = vld [vmem:[#allocation5 + $0x138] sm:$0xff]
    %v218 = vld [vmem:[#allocation5 + $0x140] sm:$0xff]
    %v219 = vld [vmem:[#allocation5 + $0x148] sm:$0xff]
    %v220 = vld [vmem:[#allocation5 + $0x150] sm:$0xff]
    %v221 = vld [vmem:[#allocation5 + $0x158] sm:$0xff]
    %v222 = vld [vmem:[#allocation5 + $0x160] sm:$0xff]
    %v223 = vld [vmem:[#allocation5 + $0x168] sm:$0xff]
    %v224 = vld [vmem:[#allocation5 + $0x170] sm:$0xff]
    %v225 = vld [vmem:[#allocation5 + $0x178] sm:$0xff]
    %v226 = vld [vmem:[#allocation5 + $0x180] sm:$0xff]
    %v227 = vld [vmem:[#allocation5 + $0x188] sm:$0xff]
    %v228 = vld [vmem:[#allocation5 + $0x190] sm:$0xff]
    %v229 = vld [vmem:[#allocation5 + $0x198] sm:$0xff]
    %v230 = vld [vmem:[#allocation5 + $0x1a0] sm:$0xff]
    %v231 = vld [vmem:[#allocation5 + $0x1a8] sm:$0xff]
    %v232 = vld [vmem:[#allocation5 + $0x1b0] sm:$0xff]
    %v233 = vld [vmem:[#allocation5 + $0x1b8] sm:$0xff]
    %v234 = vld [vmem:[#allocation5 + $0x1c0] sm:$0xff]
    %v235 = vld [vmem:[#allocation5 + $0x1c8] sm:$0xff]
    %v236 = vld [vmem:[#allocation5 + $0x1d0] sm:$0xff]
    %v237 = vld [vmem:[#allocation5 + $0x1d8] sm:$0xff]
    %v238 = vld [vmem:[#allocation5 + $0x1e0] sm:$0xff]
    %v239 = vld [vmem:[#allocation5 + $0x1e8] sm:$0xff]
    %v240 = vld [vmem:[#allocation5 + $0x1f0] sm:$0xff]
    %v241 = vld [vmem:[#allocation5 + $0x1f8] sm:$0xff]
    %v242 = vld [vmem:[#allocation5 + $0x200] sm:$0xff]
    %v243 = vld [vmem:[#allocation5 + $0x208] sm:$0xff]
    %v244 = vld [vmem:[#allocation5 + $0x210] sm:$0xff]
    %v245 = vld [vmem:[#allocation5 + $0x218] sm:$0xff]
    %v246 = vld [vmem:[#allocation5 + $0x220] sm:$0xff]
    %v247 = vld [vmem:[#allocation5 + $0x228] sm:$0xff]
    %v248 = vld [vmem:[#allocation5 + $0x230] sm:$0xff]
    %v249 = vld [vmem:[#allocation5 + $0x238] sm:$0xff]
    %v250 = vld [vmem:[#allocation5 + $0x240] sm:$0xff]
    %v251 = vld [vmem:[#allocation5 + $0x248] sm:$0xff]
    %v252 = vld [vmem:[#allocation5 + $0x250] sm:$0xff]
    %v253 = vld [vmem:[#allocation5 + $0x258] sm:$0xff]
    %v254 = vld [vmem:[#allocation5 + $0x260] sm:$0xff]
    %v255 = vld [vmem:[#allocation5 + $0x268] sm:$0xff]
    %v256 = vld [vmem:[#allocation5 + $0x270] sm:$0xff]
    %v257 = vld [vmem:[#allocation5 + $0x278] sm:$0xff]
    %v258 = vld [vmem:[#allocation5 + $0x280] sm:$0xff]
    %v259 = vld [vmem:[#allocation5 + $0x288] sm:$0xff]
    %v260 = vld [vmem:[#allocation5 + $0x290] sm:$0xff]
    %v261 = vld [vmem:[#allocation5 + $0x298] sm:$0xff]
    %v262 = vld [vmem:[#allocation5 + $0x2a0] sm:$0xff]
    %v263 = vld [vmem:[#allocation5 + $0x2a8] sm:$0xff]
    %v264 = vld [vmem:[#allocation5 + $0x2b0] sm:$0xff]
    %v265 = vld [vmem:[#allocation5 + $0x2b8] sm:$0xff]
    %v266 = vld [vmem:[#allocation5 + $0x2c0] sm:$0xff]
    %v267 = vld [vmem:[#allocation5 + $0x2c8] sm:$0xff]
    %v268 = vld [vmem:[#allocation5 + $0x2d0] sm:$0xff]
    %v269 = vld [vmem:[#allocation5 + $0x2d8] sm:$0xff]
    %v270 = vld [vmem:[#allocation5 + $0x2e0] sm:$0xff]
    %v271 = vld [vmem:[#allocation5 + $0x2e8] sm:$0xff]
    %v272 = vld [vmem:[#allocation5 + $0x2f0] sm:$0xff]
    %v273 = vld [vmem:[#allocation5 + $0x2f8] sm:$0xff]
    %v274 = vld [vmem:[#allocation5 + $0x300] sm:$0xff]
    %v275 = vld [vmem:[#allocation5 + $0x308] sm:$0xff]
    %v276 = vld [vmem:[#allocation5 + $0x310] sm:$0xff]
    %v277 = vld [vmem:[#allocation5 + $0x318] sm:$0xff]
    %v278 = vld [vmem:[#allocation5 + $0x320] sm:$0xff]
    %v279 = vld [vmem:[#allocation5 + $0x328] sm:$0xff]
    %v280 = vld [vmem:[#allocation5 + $0x330] sm:$0xff]
    %v281 = vld [vmem:[#allocation5 + $0x338] sm:$0xff]
    %v282 = vld [vmem:[#allocation5 + $0x340] sm:$0xff]
    %v283 = vld [vmem:[#allocation5 + $0x348] sm:$0xff]
    %v284 = vld [vmem:[#allocation5 + $0x350] sm:$0xff]
    %v285 = vld [vmem:[#allocation5 + $0x358] sm:$0xff]
    %v286 = vld [vmem:[#allocation5 + $0x360] sm:$0xff]
    %v287 = vld [vmem:[#allocation5 + $0x368] sm:$0xff]
    %v288 = vld [vmem:[#allocation5 + $0x370] sm:$0xff]
    %v289 = vld [vmem:[#allocation5 + $0x378] sm:$0xff]
    %v290 = vld [vmem:[#allocation5 + $0x380] sm:$0xff]
    %v291 = vld [vmem:[#allocation5 + $0x388] sm:$0xff]
    %v292 = vld [vmem:[#allocation5 + $0x390] sm:$0xff]
    %v293 = vld [vmem:[#allocation5 + $0x398] sm:$0xff]
    %v294 = vld [vmem:[#allocation5 + $0x3a0] sm:$0xff]
    %v295 = vld [vmem:[#allocation5 + $0x3a8] sm:$0xff]
    %v296 = vld [vmem:[#allocation5 + $0x3b0] sm:$0xff]
    %v297 = vld [vmem:[#allocation5 + $0x3b8] sm:$0xff]
    %v298 = vld [vmem:[#allocation5 + $0x3c0] sm:$0xff]
    %v299 = vld [vmem:[#allocation5 + $0x3c8] sm:$0xff]
    %v300 = vld [vmem:[#allocation5 + $0x3d0] sm:$0xff]
    %v301 = vld [vmem:[#allocation5 + $0x3d8] sm:$0xff]
    %v302 = vld [vmem:[#allocation5 + $0x3e0] sm:$0xff]
    %v303 = vld [vmem:[#allocation5 + $0x3e8] sm:$0xff]
    %v304 = vld [vmem:[#allocation5 + $0x3f0] sm:$0xff]
    %v305 = vld [vmem:[#allocation5 + $0x3f8] sm:$0xff]
    %v306 = vld [vmem:[#allocation5 + $0x400] sm:$0xff]
    %v307 = vld [vmem:[#allocation5 + $0x408] sm:$0xff]
    %v308 = vld [vmem:[#allocation5 + $0x410] sm:$0xff]
    %v309 = vld [vmem:[#allocation5 + $0x418] sm:$0xff]
    %v310 = vld [vmem:[#allocation5 + $0x420] sm:$0xff]
    %v311 = vld [vmem:[#allocation5 + $0x428] sm:$0xff]
    %v312 = vld [vmem:[#allocation5 + $0x430] sm:$0xff]
    %v313 = vld [vmem:[#allocation5 + $0x438] sm:$0xff]
    %v314 = vld [vmem:[#allocation5 + $0x440] sm:$0xff]
    %v315 = vld [vmem:[#allocation5 + $0x448] sm:$0xff]
    %v316 = vld [vmem:[#allocation5 + $0x450] sm:$0xff]
    %v317 = vld [vmem:[#allocation5 + $0x458] sm:$0xff]
    %v318 = vld [vmem:[#allocation5 + $0x460] sm:$0xff]
    %v319 = vld [vmem:[#allocation5 + $0x468] sm:$0xff]
    %v320 = vld [vmem:[#allocation5 + $0x470] sm:$0xff]
    %v321 = vld [vmem:[#allocation5 + $0x478] sm:$0xff]
    %v322 = vld [vmem:[#allocation5 + $0x480] sm:$0xff]
    %v323 = vld [vmem:[#allocation5 + $0x488] sm:$0xff]
    %v324 = vld [vmem:[#allocation5 + $0x490] sm:$0xff]
    %v325 = vld [vmem:[#allocation5 + $0x498] sm:$0xff]
    %v326 = vld [vmem:[#allocation5 + $0x4a0] sm:$0xff]
    %v327 = vld [vmem:[#allocation5 + $0x4a8] sm:$0xff]
    %v328 = vld [vmem:[#allocation5 + $0x4b0] sm:$0xff]
    %v329 = vld [vmem:[#allocation5 + $0x4b8] sm:$0xff]
    %v330 = vld [vmem:[#allocation5 + $0x4c0] sm:$0xff]
    %v331 = vld [vmem:[#allocation5 + $0x4c8] sm:$0xff]
    %v332 = vld [vmem:[#allocation5 + $0x4d0] sm:$0xff]
    %v333 = vld [vmem:[#allocation5 + $0x4d8] sm:$0xff]
    %v334 = vld [vmem:[#allocation5 + $0x4e0] sm:$0xff]
    %v335 = vld [vmem:[#allocation5 + $0x4e8] sm:$0xff]
    %v336 = vld [vmem:[#allocation5 + $0x4f0] sm:$0xff]
    %v337 = vld [vmem:[#allocation5 + $0x4f8] sm:$0xff]
    %v338 = vld [vmem:[#allocation5 + $0x500] sm:$0xff]
    %v339 = vld [vmem:[#allocation5 + $0x508] sm:$0xff]
    %v340 = vld [vmem:[#allocation5 + $0x510] sm:$0xff]
    %v341 = vld [vmem:[#allocation5 + $0x518] sm:$0xff]
    %v342 = vld [vmem:[#allocation5 + $0x520] sm:$0xff]
    %v343 = vld [vmem:[#allocation5 + $0x528] sm:$0xff]
    %v344 = vld [vmem:[#allocation5 + $0x530] sm:$0xff]
    %v345 = vld [vmem:[#allocation5 + $0x538] sm:$0xff]
    %v346 = vld [vmem:[#allocation5 + $0x540] sm:$0xff]
    %v347 = vld [vmem:[#allocation5 + $0x548] sm:$0xff]
    %v348 = vld [vmem:[#allocation5 + $0x550] sm:$0xff]
    %v349 = vld [vmem:[#allocation5 + $0x558] sm:$0xff]
    %v350 = vld [vmem:[#allocation5 + $0x560] sm:$0xff]
    %v351 = vld [vmem:[#allocation5 + $0x568] sm:$0xff]
    %v352 = vld [vmem:[#allocation5 + $0x570] sm:$0xff]
    %v353 = vld [vmem:[#allocation5 + $0x578] sm:$0xff]
    %v354 = vld [vmem:[#allocation5 + $0x580] sm:$0xff]
    %v355 = vld [vmem:[#allocation5 + $0x588] sm:$0xff]
    %v356 = vld [vmem:[#allocation5 + $0x590] sm:$0xff]
    %v357 = vld [vmem:[#allocation5 + $0x598] sm:$0xff]
    %v358 = vld [vmem:[#allocation5 + $0x5a0] sm:$0xff]
    %v359 = vld [vmem:[#allocation5 + $0x5a8] sm:$0xff]
    %v360 = vld [vmem:[#allocation5 + $0x5b0] sm:$0xff]
    %v361 = vld [vmem:[#allocation5 + $0x5b8] sm:$0xff]
    %v362 = vld [vmem:[#allocation5 + $0x5c0] sm:$0xff]
    %v363 = vld [vmem:[#allocation5 + $0x5c8] sm:$0xff]
    %v364 = vld [vmem:[#allocation5 + $0x5d0] sm:$0xff]
    %v365 = vld [vmem:[#allocation5 + $0x5d8] sm:$0xff]
    %v366 = vld [vmem:[#allocation5 + $0x5e0] sm:$0xff]
    %v367 = vld [vmem:[#allocation5 + $0x5e8] sm:$0xff]
    %v368 = vld [vmem:[#allocation5 + $0x5f0] sm:$0xff]
    %v369 = vld [vmem:[#allocation5 + $0x5f8] sm:$0xff]
    %v370 = vld [vmem:[#allocation5 + $0x600] sm:$0xff]
    %v371 = vld [vmem:[#allocation5 + $0x608] sm:$0xff]
    %v372 = vld [vmem:[#allocation5 + $0x610] sm:$0xff]
    %v373 = vld [vmem:[#allocation5 + $0x618] sm:$0xff]
    %v374 = vld [vmem:[#allocation5 + $0x620] sm:$0xff]
    %v375 = vld [vmem:[#allocation5 + $0x628] sm:$0xff]
    %v376 = vld [vmem:[#allocation5 + $0x630] sm:$0xff]
    %v377 = vld [vmem:[#allocation5 + $0x638] sm:$0xff]
    %v378 = vld [vmem:[#allocation5 + $0x640] sm:$0xff]
    %v379 = vld [vmem:[#allocation5 + $0x648] sm:$0xff]
    %v380 = vld [vmem:[#allocation5 + $0x650] sm:$0xff]
    %v381 = vld [vmem:[#allocation5 + $0x658] sm:$0xff]
    %v382 = vld [vmem:[#allocation5 + $0x660] sm:$0xff]
    %v383 = vld [vmem:[#allocation5 + $0x668] sm:$0xff]
    %v384 = vld [vmem:[#allocation5 + $0x670] sm:$0xff]
    %v385 = vld [vmem:[#allocation5 + $0x678] sm:$0xff]
    %v386 = vld [vmem:[#allocation5 + $0x680] sm:$0xff]
    %v387 = vld [vmem:[#allocation5 + $0x688] sm:$0xff]
    %v388 = vld [vmem:[#allocation5 + $0x690] sm:$0xff]
    %v389 = vld [vmem:[#allocation5 + $0x698] sm:$0xff]
    %v390 = vld [vmem:[#allocation5 + $0x6a0] sm:$0xff]
    %v391 = vld [vmem:[#allocation5 + $0x6a8] sm:$0xff]
    %v392 = vld [vmem:[#allocation5 + $0x6b0] sm:$0xff]
    %v393 = vld [vmem:[#allocation5 + $0x6b8] sm:$0xff]
    %v394 = vld [vmem:[#allocation5 + $0x6c0] sm:$0xff]
    %v395 = vld [vmem:[#allocation5 + $0x6c8] sm:$0xff]
    %v396 = vld [vmem:[#allocation5 + $0x6d0] sm:$0xff]
    %v397 = vld [vmem:[#allocation5 + $0x6d8] sm:$0xff]
    %v398 = vld [vmem:[#allocation5 + $0x6e0] sm:$0xff]
    %v399 = vld [vmem:[#allocation5 + $0x6e8] sm:$0xff]
    %v400 = vld [vmem:[#allocation5 + $0x6f0] sm:$0xff]
    %v401 = vld [vmem:[#allocation5 + $0x6f8] sm:$0xff]
    %v402 = vld [vmem:[#allocation5 + $0x700] sm:$0xff]
    %v403 = vld [vmem:[#allocation5 + $0x708] sm:$0xff]
    %v404 = vld [vmem:[#allocation5 + $0x710] sm:$0xff]
    %v405 = vld [vmem:[#allocation5 + $0x718] sm:$0xff]
    %v406 = vld [vmem:[#allocation5 + $0x720] sm:$0xff]
    %v407 = vld [vmem:[#allocation5 + $0x728] sm:$0xff]
    %v408 = vld [vmem:[#allocation5 + $0x730] sm:$0xff]
    %v409 = vld [vmem:[#allocation5 + $0x738] sm:$0xff]
    %v410 = vld [vmem:[#allocation5 + $0x740] sm:$0xff]
    %v411 = vld [vmem:[#allocation5 + $0x748] sm:$0xff]
    %v412 = vld [vmem:[#allocation5 + $0x750] sm:$0xff]
    %v413 = vld [vmem:[#allocation5 + $0x758] sm:$0xff]
    %v414 = vld [vmem:[#allocation5 + $0x760] sm:$0xff]
    %v415 = vld [vmem:[#allocation5 + $0x768] sm:$0xff]
    %v416 = vld [vmem:[#allocation5 + $0x770] sm:$0xff]
    %v417 = vld [vmem:[#allocation5 + $0x778] sm:$0xff]
    %v418 = vld [vmem:[#allocation5 + $0x780] sm:$0xff]
    %v419 = vld [vmem:[#allocation5 + $0x788] sm:$0xff]
    %v420 = vld [vmem:[#allocation5 + $0x790] sm:$0xff]
    %v421 = vld [vmem:[#allocation5 + $0x798] sm:$0xff]
    %v422 = vld [vmem:[#allocation5 + $0x7a0] sm:$0xff]
    %v423 = vld [vmem:[#allocation5 + $0x7a8] sm:$0xff]
    %v424 = vld [vmem:[#allocation5 + $0x7b0] sm:$0xff]
    %v425 = vld [vmem:[#allocation5 + $0x7b8] sm:$0xff]
    %v426 = vld [vmem:[#allocation5 + $0x7c0] sm:$0xff]
    %v427 = vld [vmem:[#allocation5 + $0x7c8] sm:$0xff]
    %v428 = vld [vmem:[#allocation5 + $0x7d0] sm:$0xff]
    %v429 = vld [vmem:[#allocation5 + $0x7d8] sm:$0xff]
    %v430 = vld [vmem:[#allocation5 + $0x7e0] sm:$0xff]
    %v431 = vld [vmem:[#allocation5 + $0x7e8] sm:$0xff]
    %v432 = vld [vmem:[#allocation5 + $0x7f0] sm:$0xff]
    %v433 = vld [vmem:[#allocation5 + $0x7f8] sm:$0xff]
    %v434 = vld [vmem:[#allocation5 + $0x800] sm:$0xff]
    %v435 = vld [vmem:[#allocation5 + $0x808] sm:$0xff]
    %v436 = vld [vmem:[#allocation5 + $0x810] sm:$0xff]
    %v437 = vld [vmem:[#allocation5 + $0x818] sm:$0xff]
    %v438 = vld [vmem:[#allocation5 + $0x820] sm:$0xff]
    %v439 = vld [vmem:[#allocation5 + $0x828] sm:$0xff]
    %v440 = vld [vmem:[#allocation5 + $0x830] sm:$0xff]
    %v441 = vld [vmem:[#allocation5 + $0x838] sm:$0xff]
    %v442 = vld [vmem:[#allocation5 + $0x840] sm:$0xff]
    %v443 = vld [vmem:[#allocation5 + $0x848] sm:$0xff]
    %v444 = vld [vmem:[#allocation5 + $0x850] sm:$0xff]
    %v445 = vld [vmem:[#allocation5 + $0x858] sm:$0xff]
    %v446 = vld [vmem:[#allocation5 + $0x860] sm:$0xff]
    %v447 = vld [vmem:[#allocation5 + $0x868] sm:$0xff]
    %v448 = vld [vmem:[#allocation5 + $0x870] sm:$0xff]
    %v449 = vld [vmem:[#allocation5 + $0x878] sm:$0xff]
    %v450 = vld [vmem:[#allocation5 + $0x880] sm:$0xff]
    %v451 = vld [vmem:[#allocation5 + $0x888] sm:$0xff]
    %v452 = vld [vmem:[#allocation5 + $0x890] sm:$0xff]
    %v453 = vld [vmem:[#allocation5 + $0x898] sm:$0xff]
    %v454 = vld [vmem:[#allocation5 + $0x8a0] sm:$0xff]
    %v455 = vld [vmem:[#allocation5 + $0x8a8] sm:$0xff]
    %v456 = vld [vmem:[#allocation5 + $0x8b0] sm:$0xff]
    %v457 = vld [vmem:[#allocation5 + $0x8b8] sm:$0xff]
    %v458 = vld [vmem:[#allocation5 + $0x8c0] sm:$0xff]
    %v459 = vld [vmem:[#allocation5 + $0x8c8] sm:$0xff]
    %v460 = vld [vmem:[#allocation5 + $0x8d0] sm:$0xff]
    %v461 = vld [vmem:[#allocation5 + $0x8d8] sm:$0xff]
    %v462 = vld [vmem:[#allocation5 + $0x8e0] sm:$0xff]
    %v463 = vld [vmem:[#allocation5 + $0x8e8] sm:$0xff]
    %v464 = vld [vmem:[#allocation5 + $0x8f0] sm:$0xff]
    %v465 = vld [vmem:[#allocation5 + $0x8f8] sm:$0xff]
    %v466 = vld [vmem:[#allocation7] sm:$0xff]
    %v467 = vld [vmem:[#allocation7 + $0x8] sm:$0x1]
    %v470 = vlaneseq
    %v471 = vshrl.u32 %v470, 7
    %v472 = vsub.s32 0, %v471
    %v473 = vrot.slane %v466, %v472
    %v474 = vlaneseq
    %v475 = vshrl.u32 %v474, 7
    %v476 = vsub.s32 1, %v475
    %v477 = vrot.slane %v466, %v476
    %v478 = vlaneseq
    %v479 = vshrl.u32 %v478, 7
    %v480 = vsub.s32 2, %v479
    %v481 = vrot.slane %v466, %v480
    %v482 = vlaneseq
    %v483 = vshrl.u32 %v482, 7
    %v484 = vsub.s32 3, %v483
    %v485 = vrot.slane %v466, %v484
    %v486 = vlaneseq
    %v487 = vshrl.u32 %v486, 7
    %v488 = vsub.s32 4, %v487
    %v489 = vrot.slane %v466, %v488
    %v490 = vlaneseq
    %v491 = vshrl.u32 %v490, 7
    %v492 = vsub.s32 5, %v491
    %v493 = vrot.slane %v466, %v492
    %v494 = vlaneseq
    %v495 = vshrl.u32 %v494, 7
    %v496 = vsub.s32 6, %v495
    %v497 = vrot.slane %v466, %v496
    %v498 = vlaneseq
    %v499 = vshrl.u32 %v498, 7
    %v500 = vsub.s32 7, %v499
    %v501 = vrot.slane %v466, %v500
    %v502 = vlaneseq
    %v503 = vshrl.u32 %v502, 7
    %v504 = vsub.s32 0, %v503
    %v505 = vrot.slane %v467, %v504
    %515 = vmatprep.subr.mxu0 %v179
    %516 = vmatpush1.msra.mxu0 %v178
    %517 = vmatprep.subr.mxu0 %v188
    %518 = vmatpush1.msra.mxu0 %v187
    %519 = vmatprep.subr.mxu0 %v197
    %520 = vmatpush1.msra.mxu0 %v196
    %521 = vmatprep.subr.mxu0 %v206
    %522 = vmatpush1.msra.mxu0 %v205
    %523 = vmatprep.subr.mxu0 %v215
    %524 = vmatpush1.msra.mxu0 %v214
    %525 = vmatprep.subr.mxu0 %v224
    %526 = vmatpush1.msra.mxu0 %v223
    %527 = vmatprep.subr.mxu0 %v233
    %528 = vmatpush1.msra.mxu0 %v232
    %529 = vmatprep.subr.mxu0 %v242
    %530 = vmatpush1.msra.mxu0 %v241
    %531 = vmatprep.subr.mxu0 %v251
    %532 = vmatpush1.msra.mxu0 %v250
    %533 = vmatprep.subr.mxu0 %v260
    %534 = vmatpush1.msra.mxu0 %v259
    %535 = vmatprep.subr.mxu0 %v269
    %536 = vmatpush1.msra.mxu0 %v268
    %537 = vmatprep.subr.mxu0 %v278
    %538 = vmatpush1.msra.mxu0 %v277
    %539 = vmatprep.subr.mxu0 %v287
    %540 = vmatpush1.msra.mxu0 %v286
    %541 = vmatprep.subr.mxu0 %v296
    %542 = vmatpush1.msra.mxu0 %v295
    %543 = vmatprep.subr.mxu0 %v305
    %544 = vmatpush1.msra.mxu0 %v304
    %545 = vmatprep.subr.mxu0 %v314
    %546 = vmatpush1.msra.mxu0 %v313
    %547 = vmatprep.subr.mxu0 %v323
    %548 = vmatpush1.msra.mxu0 %v322
    %549 = vmatprep.subr.mxu0 %v332
    %550 = vmatpush1.msra.mxu0 %v331
    %551 = vmatprep.subr.mxu0 %v341
    %552 = vmatpush1.msra.mxu0 %v340
    %553 = vmatprep.subr.mxu0 %v350
    %554 = vmatpush1.msra.mxu0 %v349
    %555 = vmatprep.subr.mxu0 %v359
    %556 = vmatpush1.msra.mxu0 %v358
    %557 = vmatprep.subr.mxu0 %v368
    %558 = vmatpush1.msra.mxu0 %v367
    %559 = vmatprep.subr.mxu0 %v377
    %560 = vmatpush1.msra.mxu0 %v376
    %561 = vmatprep.subr.mxu0 %v386
    %562 = vmatpush1.msra.mxu0 %v385
    %563 = vmatprep.subr.mxu0 %v395
    %564 = vmatpush1.msra.mxu0 %v394
    %565 = vmatprep.subr.mxu0 %v404
    %566 = vmatpush1.msra.mxu0 %v403
    %567 = vmatprep.subr.mxu0 %v413
    %568 = vmatpush1.msra.mxu0 %v412
    %569 = vmatprep.subr.mxu0 %v422
    %570 = vmatpush1.msra.mxu0 %v421
    %571 = vmatprep.subr.mxu0 %v431
    %572 = vmatpush1.msra.mxu0 %v430
    %573 = vmatprep.subr.mxu0 %v440
    %574 = vmatpush1.msra.mxu0 %v439
    %575 = vmatprep.subr.mxu0 %v449
    %576 = vmatpush1.msra.mxu0 %v448
    %577 = vmatprep.subr.mxu0 %v458
    %578 = vmatpush1.msra.mxu0 %v457
    %579 = vmatprep.mubr.f32.mxu0 %v177
    %580 = vmatmul.mubr.f32.gmra.mrb[0].mxu0 %v176
    %v581 = vpop.f32.mrb[0].mxu0
    %v582 = vadd.f32 %v473, %v581
    %v583 = vpop.f32.mrb[0].mxu0
    %v584 = vadd.f32 %v477, %v583
    %585 = vdwg.mxu0
    %586 = vmatprep.subr.mxu0 %v181
    %587 = vmatpush1.msra.mxu0 %v180
    %588 = vmatprep.subr.mxu0 %v190
    %589 = vmatpush1.msra.mxu0 %v189
    %590 = vmatprep.subr.mxu0 %v199
    %591 = vmatpush1.msra.mxu0 %v198
    %592 = vmatprep.subr.mxu0 %v208
    %593 = vmatpush1.msra.mxu0 %v207
    %594 = vmatprep.subr.mxu0 %v217
    %595 = vmatpush1.msra.mxu0 %v216
    %596 = vmatprep.subr.mxu0 %v226
    %597 = vmatpush1.msra.mxu0 %v225
    %598 = vmatprep.subr.mxu0 %v235
    %599 = vmatpush1.msra.mxu0 %v234
    %600 = vmatprep.subr.mxu0 %v244
    %601 = vmatpush1.msra.mxu0 %v243
    %602 = vmatprep.subr.mxu0 %v253
    %603 = vmatpush1.msra.mxu0 %v252
    %604 = vmatprep.subr.mxu0 %v262
    %605 = vmatpush1.msra.mxu0 %v261
    %606 = vmatprep.subr.mxu0 %v271
    %607 = vmatpush1.msra.mxu0 %v270
    %608 = vmatprep.subr.mxu0 %v280
    %609 = vmatpush1.msra.mxu0 %v279
    %610 = vmatprep.subr.mxu0 %v289
    %611 = vmatpush1.msra.mxu0 %v288
    %612 = vmatprep.subr.mxu0 %v298
    %613 = vmatpush1.msra.mxu0 %v297
    %614 = vmatprep.subr.mxu0 %v307
    %615 = vmatpush1.msra.mxu0 %v306
    %616 = vmatprep.subr.mxu0 %v316
    %617 = vmatpush1.msra.mxu0 %v315
    %618 = vmatprep.subr.mxu0 %v325
    %619 = vmatpush1.msra.mxu0 %v324
    %620 = vmatprep.subr.mxu0 %v334
    %621 = vmatpush1.msra.mxu0 %v333
    %622 = vmatprep.subr.mxu0 %v343
    %623 = vmatpush1.msra.mxu0 %v342
    %624 = vmatprep.subr.mxu0 %v352
    %625 = vmatpush1.msra.mxu0 %v351
    %626 = vmatprep.subr.mxu0 %v361
    %627 = vmatpush1.msra.mxu0 %v360
    %628 = vmatprep.subr.mxu0 %v370
    %629 = vmatpush1.msra.mxu0 %v369
    %630 = vmatprep.subr.mxu0 %v379
    %631 = vmatpush1.msra.mxu0 %v378
    %632 = vmatprep.subr.mxu0 %v388
    %633 = vmatpush1.msra.mxu0 %v387
    %634 = vmatprep.subr.mxu0 %v397
    %635 = vmatpush1.msra.mxu0 %v396
    %636 = vmatprep.subr.mxu0 %v406
    %637 = vmatpush1.msra.mxu0 %v405
    %638 = vmatprep.subr.mxu0 %v415
    %639 = vmatpush1.msra.mxu0 %v414
    %640 = vmatprep.subr.mxu0 %v424
    %641 = vmatpush1.msra.mxu0 %v423
    %642 = vmatprep.subr.mxu0 %v433
    %643 = vmatpush1.msra.mxu0 %v432
    %644 = vmatprep.subr.mxu0 %v442
    %645 = vmatpush1.msra.mxu0 %v441
    %646 = vmatprep.subr.mxu0 %v451
    %647 = vmatpush1.msra.mxu0 %v450
    %648 = vmatprep.subr.mxu0 %v460
    %649 = vmatpush1.msra.mxu0 %v459
    %650 = vmatprep.mubr.f32.mxu0 %v177
    %651 = vmatmul.mubr.f32.gmra.mrb[0].mxu0 %v176
    %v652 = vpop.f32.mrb[0].mxu0
    %v653 = vadd.f32 %v481, %v652
    %v654 = vpop.f32.mrb[0].mxu0
    %v655 = vadd.f32 %v485, %v654
    %656 = vdwg.mxu0
    %657 = vmatprep.subr.mxu0 %v183
    %658 = vmatpush1.msra.mxu0 %v182
    %659 = vmatprep.subr.mxu0 %v192
    %660 = vmatpush1.msra.mxu0 %v191
    %661 = vmatprep.subr.mxu0 %v201
    %662 = vmatpush1.msra.mxu0 %v200
    %663 = vmatprep.subr.mxu0 %v210
    %664 = vmatpush1.msra.mxu0 %v209
    %665 = vmatprep.subr.mxu0 %v219
    %666 = vmatpush1.msra.mxu0 %v218
    %667 = vmatprep.subr.mxu0 %v228
    %668 = vmatpush1.msra.mxu0 %v227
    %669 = vmatprep.subr.mxu0 %v237
    %670 = vmatpush1.msra.mxu0 %v236
    %671 = vmatprep.subr.mxu0 %v246
    %672 = vmatpush1.msra.mxu0 %v245
    %673 = vmatprep.subr.mxu0 %v255
    %674 = vmatpush1.msra.mxu0 %v254
    %675 = vmatprep.subr.mxu0 %v264
    %676 = vmatpush1.msra.mxu0 %v263
    %677 = vmatprep.subr.mxu0 %v273
    %678 = vmatpush1.msra.mxu0 %v272
    %679 = vmatprep.subr.mxu0 %v282
    %680 = vmatpush1.msra.mxu0 %v281
    %681 = vmatprep.subr.mxu0 %v291
    %682 = vmatpush1.msra.mxu0 %v290
    %683 = vmatprep.subr.mxu0 %v300
    %684 = vmatpush1.msra.mxu0 %v299
    %685 = vmatprep.subr.mxu0 %v309
    %686 = vmatpush1.msra.mxu0 %v308
    %687 = vmatprep.subr.mxu0 %v318
    %688 = vmatpush1.msra.mxu0 %v317
    %689 = vmatprep.subr.mxu0 %v327
    %690 = vmatpush1.msra.mxu0 %v326
    %691 = vmatprep.subr.mxu0 %v336
    %692 = vmatpush1.msra.mxu0 %v335
    %693 = vmatprep.subr.mxu0 %v345
    %694 = vmatpush1.msra.mxu0 %v344
    %695 = vmatprep.subr.mxu0 %v354
    %696 = vmatpush1.msra.mxu0 %v353
    %697 = vmatprep.subr.mxu0 %v363
    %698 = vmatpush1.msra.mxu0 %v362
    %699 = vmatprep.subr.mxu0 %v372
    %700 = vmatpush1.msra.mxu0 %v371
    %701 = vmatprep.subr.mxu0 %v381
    %702 = vmatpush1.msra.mxu0 %v380
    %703 = vmatprep.subr.mxu0 %v390
    %704 = vmatpush1.msra.mxu0 %v389
    %705 = vmatprep.subr.mxu0 %v399
    %706 = vmatpush1.msra.mxu0 %v398
    %707 = vmatprep.subr.mxu0 %v408
    %708 = vmatpush1.msra.mxu0 %v407
    %709 = vmatprep.subr.mxu0 %v417
    %710 = vmatpush1.msra.mxu0 %v416
    %711 = vmatprep.subr.mxu0 %v426
    %712 = vmatpush1.msra.mxu0 %v425
    %713 = vmatprep.subr.mxu0 %v435
    %714 = vmatpush1.msra.mxu0 %v434
    %715 = vmatprep.subr.mxu0 %v444
    %716 = vmatpush1.msra.mxu0 %v443
    %717 = vmatprep.subr.mxu0 %v453
    %718 = vmatpush1.msra.mxu0 %v452
    %719 = vmatprep.subr.mxu0 %v462
    %720 = vmatpush1.msra.mxu0 %v461
    %721 = vmatprep.mubr.f32.mxu0 %v177
    %722 = vmatmul.mubr.f32.gmra.mrb[0].mxu0 %v176
    %v723 = vpop.f32.mrb[0].mxu0
    %v724 = vadd.f32 %v489, %v723
    %v725 = vpop.f32.mrb[0].mxu0
    %v726 = vadd.f32 %v493, %v725
    %727 = vdwg.mxu0
    %728 = vmatprep.subr.mxu0 %v185
    %729 = vmatpush1.msra.mxu0 %v184
    %730 = vmatprep.subr.mxu0 %v194
    %731 = vmatpush1.msra.mxu0 %v193
    %732 = vmatprep.subr.mxu0 %v203
    %733 = vmatpush1.msra.mxu0 %v202
    %734 = vmatprep.subr.mxu0 %v212
    %735 = vmatpush1.msra.mxu0 %v211
    %736 = vmatprep.subr.mxu0 %v221
    %737 = vmatpush1.msra.mxu0 %v220
    %738 = vmatprep.subr.mxu0 %v230
    %739 = vmatpush1.msra.mxu0 %v229
    %740 = vmatprep.subr.mxu0 %v239
    %741 = vmatpush1.msra.mxu0 %v238
    %742 = vmatprep.subr.mxu0 %v248
    %743 = vmatpush1.msra.mxu0 %v247
    %744 = vmatprep.subr.mxu0 %v257
    %745 = vmatpush1.msra.mxu0 %v256
    %746 = vmatprep.subr.mxu0 %v266
    %747 = vmatpush1.msra.mxu0 %v265
    %748 = vmatprep.subr.mxu0 %v275
    %749 = vmatpush1.msra.mxu0 %v274
    %750 = vmatprep.subr.mxu0 %v284
    %751 = vmatpush1.msra.mxu0 %v283
    %752 = vmatprep.subr.mxu0 %v293
    %753 = vmatpush1.msra.mxu0 %v292
    %754 = vmatprep.subr.mxu0 %v302
    %755 = vmatpush1.msra.mxu0 %v301
    %756 = vmatprep.subr.mxu0 %v311
    %757 = vmatpush1.msra.mxu0 %v310
    %758 = vmatprep.subr.mxu0 %v320
    %759 = vmatpush1.msra.mxu0 %v319
    %760 = vmatprep.subr.mxu0 %v329
    %761 = vmatpush1.msra.mxu0 %v328
    %762 = vmatprep.subr.mxu0 %v338
    %763 = vmatpush1.msra.mxu0 %v337
    %764 = vmatprep.subr.mxu0 %v347
    %765 = vmatpush1.msra.mxu0 %v346
    %766 = vmatprep.subr.mxu0 %v356
    %767 = vmatpush1.msra.mxu0 %v355
    %768 = vmatprep.subr.mxu0 %v365
    %769 = vmatpush1.msra.mxu0 %v364
    %770 = vmatprep.subr.mxu0 %v374
    %771 = vmatpush1.msra.mxu0 %v373
    %772 = vmatprep.subr.mxu0 %v383
    %773 = vmatpush1.msra.mxu0 %v382
    %774 = vmatprep.subr.mxu0 %v392
    %775 = vmatpush1.msra.mxu0 %v391
    %776 = vmatprep.subr.mxu0 %v401
    %777 = vmatpush1.msra.mxu0 %v400
    %778 = vmatprep.subr.mxu0 %v410
    %779 = vmatpush1.msra.mxu0 %v409
    %780 = vmatprep.subr.mxu0 %v419
    %781 = vmatpush1.msra.mxu0 %v418
    %782 = vmatprep.subr.mxu0 %v428
    %783 = vmatpush1.msra.mxu0 %v427
    %784 = vmatprep.subr.mxu0 %v437
    %785 = vmatpush1.msra.mxu0 %v436
    %786 = vmatprep.subr.mxu0 %v446
    %787 = vmatpush1.msra.mxu0 %v445
    %788 = vmatprep.subr.mxu0 %v455
    %789 = vmatpush1.msra.mxu0 %v454
    %790 = vmatprep.subr.mxu0 %v464
    %791 = vmatpush1.msra.mxu0 %v463
    %792 = vmatprep.mubr.f32.mxu0 %v177
    %793 = vmatmul.mubr.f32.gmra.mrb[0].mxu0 %v176
    %v794 = vpop.f32.mrb[0].mxu0
    %v795 = vadd.f32 %v497, %v794
    %v796 = vpop.f32.mrb[0].mxu0
    %v797 = vadd.f32 %v501, %v796
    %798 = vdwg.mxu0
    %799 = vmatprep.subr.mxu0 0.0
    %800 = vmatpush1.msra.mxu0 %v186
    %801 = vmatprep.subr.mxu0 0.0
    %802 = vmatpush1.msra.mxu0 %v195
    %803 = vmatprep.subr.mxu0 0.0
    %804 = vmatpush1.msra.mxu0 %v204
    %805 = vmatprep.subr.mxu0 0.0
    %806 = vmatpush1.msra.mxu0 %v213
    %807 = vmatprep.subr.mxu0 0.0
    %808 = vmatpush1.msra.mxu0 %v222
    %809 = vmatprep.subr.mxu0 0.0
    %810 = vmatpush1.msra.mxu0 %v231
    %811 = vmatprep.subr.mxu0 0.0
    %812 = vmatpush1.msra.mxu0 %v240
    %813 = vmatprep.subr.mxu0 0.0
    %814 = vmatpush1.msra.mxu0 %v249
    %815 = vmatprep.subr.mxu0 0.0
    %816 = vmatpush1.msra.mxu0 %v258
    %817 = vmatprep.subr.mxu0 0.0
    %818 = vmatpush1.msra.mxu0 %v267
    %819 = vmatprep.subr.mxu0 0.0
    %820 = vmatpush1.msra.mxu0 %v276
    %821 = vmatprep.subr.mxu0 0.0
    %822 = vmatpush1.msra.mxu0 %v285
    %823 = vmatprep.subr.mxu0 0.0
    %824 = vmatpush1.msra.mxu0 %v294
    %825 = vmatprep.subr.mxu0 0.0
    %826 = vmatpush1.msra.mxu0 %v303
    %827 = vmatprep.subr.mxu0 0.0
    %828 = vmatpush1.msra.mxu0 %v312
    %829 = vmatprep.subr.mxu0 0.0
    %830 = vmatpush1.msra.mxu0 %v321
    %831 = vmatprep.subr.mxu0 0.0
    %832 = vmatpush1.msra.mxu0 %v330
    %833 = vmatprep.subr.mxu0 0.0
    %834 = vmatpush1.msra.mxu0 %v339
    %835 = vmatprep.subr.mxu0 0.0
    %836 = vmatpush1.msra.mxu0 %v348
    %837 = vmatprep.subr.mxu0 0.0
    %838 = vmatpush1.msra.mxu0 %v357
    %839 = vmatprep.subr.mxu0 0.0
    %840 = vmatpush1.msra.mxu0 %v366
    %841 = vmatprep.subr.mxu0 0.0
    %842 = vmatpush1.msra.mxu0 %v375
    %843 = vmatprep.subr.mxu0 0.0
    %844 = vmatpush1.msra.mxu0 %v384
    %845 = vmatprep.subr.mxu0 0.0
    %846 = vmatpush1.msra.mxu0 %v393
    %847 = vmatprep.subr.mxu0 0.0
    %848 = vmatpush1.msra.mxu0 %v402
    %849 = vmatprep.subr.mxu0 0.0
    %850 = vmatpush1.msra.mxu0 %v411
    %851 = vmatprep.subr.mxu0 0.0
    %852 = vmatpush1.msra.mxu0 %v420
    %853 = vmatprep.subr.mxu0 0.0
    %854 = vmatpush1.msra.mxu0 %v429
    %855 = vmatprep.subr.mxu0 0.0
    %856 = vmatpush1.msra.mxu0 %v438
    %857 = vmatprep.subr.mxu0 0.0
    %858 = vmatpush1.msra.mxu0 %v447
    %859 = vmatprep.subr.mxu0 0.0
    %860 = vmatpush1.msra.mxu0 %v456
    %861 = vmatprep.subr.mxu0 0.0
    %862 = vmatpush1.msra.mxu0 %v465
    %863 = vmatprep.mubr.f32.mxu0 %v177
    %864 = vmatmul.mubr.f32.gmra.mrb[0].mxu0 %v176
    %v865 = vpop.f32.mrb[0].mxu0
    %v866 = vadd.f32 %v505, %v865
    %v867 = vpop.f32.mrb[0].mxu0
    %868 = vdwg.mxu0
    %v869 = vmax.f32 %v582, 0.0
    %v870 = vmax.f32 %v584, 0.0
    %v871 = vmax.f32 %v653, 0.0
    %v872 = vmax.f32 %v655, 0.0
    %v873 = vmax.f32 %v724, 0.0
    %v874 = vmax.f32 %v726, 0.0
    %v875 = vmax.f32 %v795, 0.0
    %v876 = vmax.f32 %v797, 0.0
    %v877 = vmax.f32 %v866, 0.0
    %v878 = vmax.f32 %v869, %v872
    %v879 = vmax.f32 %v870, %v873
    %v880 = vmax.f32 %v871, %v874
    %v881 = vmax.f32 %v878, %v875
    %v882 = vmax.f32 %v879, %v876
    %v883 = vmax.f32 %v880, %v877
    %v884 = vld [vmem:[#allocation8] sm:$0xff]
    %v885 = vld [vmem:[#allocation8 + $0x8] sm:$0xff]
    %v886 = vld [vmem:[#allocation8 + $0x10] sm:$0xff]
    %v887 = vld [vmem:[#allocation8 + $0x18] sm:$0xff]
    %v888 = vld [vmem:[#allocation8 + $0x20] sm:$0xff]
    %v889 = vld [vmem:[#allocation8 + $0x28] sm:$0xff]
    %v890 = vld [vmem:[#allocation8 + $0x30] sm:$0xff]
    %v891 = vld [vmem:[#allocation8 + $0x38] sm:$0xff]
    %v892 = vld [vmem:[#allocation8 + $0x40] sm:$0xff]
    %v893 = vld [vmem:[#allocation8 + $0x48] sm:$0xff]
    %v894 = vld [vmem:[#allocation8 + $0x50] sm:$0xff]
    %v895 = vld [vmem:[#allocation8 + $0x58] sm:$0xff]
    %v896 = vld [vmem:[#allocation8 + $0x60] sm:$0xff]
    %v897 = vld [vmem:[#allocation8 + $0x68] sm:$0xff]
    %v898 = vld [vmem:[#allocation8 + $0x70] sm:$0xff]
    %v899 = vld [vmem:[#allocation8 + $0x78] sm:$0xff]
    %v900 = vld [vmem:[#allocation8 + $0x80] sm:$0xff]
    %v901 = vld [vmem:[#allocation8 + $0x88] sm:$0xff]
    %v902 = vld [vmem:[#allocation8 + $0x90] sm:$0xff]
    %v903 = vld [vmem:[#allocation8 + $0x98] sm:$0xff]
    %v904 = vld [vmem:[#allocation8 + $0xa0] sm:$0xff]
    %v905 = vld [vmem:[#allocation8 + $0xa8] sm:$0xff]
    %v906 = vld [vmem:[#allocation8 + $0xb0] sm:$0xff]
    %v907 = vld [vmem:[#allocation8 + $0xb8] sm:$0xff]
    %v908 = vld [vmem:[#allocation8 + $0xc0] sm:$0xff]
    %v909 = vld [vmem:[#allocation8 + $0xc8] sm:$0xff]
    %v910 = vld [vmem:[#allocation8 + $0xd0] sm:$0xff]
    %v911 = vld [vmem:[#allocation8 + $0xd8] sm:$0xff]
    %v912 = vld [vmem:[#allocation8 + $0xe0] sm:$0xff]
    %v913 = vld [vmem:[#allocation8 + $0xe8] sm:$0xff]
    %v914 = vld [vmem:[#allocation8 + $0xf0] sm:$0xff]
    %v915 = vld [vmem:[#allocation8 + $0xf8] sm:$0xff]
    %v916 = vld [vmem:[#allocation8 + $0x100] sm:$0xff]
    %v917 = vld [vmem:[#allocation8 + $0x108] sm:$0xff]
    %v918 = vld [vmem:[#allocation8 + $0x110] sm:$0xff]
    %v919 = vld [vmem:[#allocation8 + $0x118] sm:$0xff]
    %v920 = vld [vmem:[#allocation8 + $0x120] sm:$0xff]
    %v921 = vld [vmem:[#allocation8 + $0x128] sm:$0xff]
    %v922 = vld [vmem:[#allocation8 + $0x130] sm:$0xff]
    %v923 = vld [vmem:[#allocation8 + $0x138] sm:$0xff]
    %v924 = vld [vmem:[#allocation8 + $0x140] sm:$0xff]
    %v925 = vld [vmem:[#allocation8 + $0x148] sm:$0xff]
    %v926 = vld [vmem:[#allocation8 + $0x150] sm:$0xff]
    %v927 = vld [vmem:[#allocation8 + $0x158] sm:$0xff]
    %v928 = vld [vmem:[#allocation8 + $0x160] sm:$0xff]
    %v929 = vld [vmem:[#allocation8 + $0x168] sm:$0xff]
    %v930 = vld [vmem:[#allocation8 + $0x170] sm:$0xff]
    %v931 = vld [vmem:[#allocation8 + $0x178] sm:$0xff]
    %v932 = vld [vmem:[#allocation8 + $0x180] sm:$0xff]
    %v933 = vld [vmem:[#allocation8 + $0x188] sm:$0xff]
    %v934 = vld [vmem:[#allocation8 + $0x190] sm:$0xff]
    %v935 = vld [vmem:[#allocation8 + $0x198] sm:$0xff]
    %v936 = vld [vmem:[#allocation8 + $0x1a0] sm:$0xff]
    %v937 = vld [vmem:[#allocation8 + $0x1a8] sm:$0xff]
    %v938 = vld [vmem:[#allocation8 + $0x1b0] sm:$0xff]
    %v939 = vld [vmem:[#allocation8 + $0x1b8] sm:$0xff]
    %v940 = vld [vmem:[#allocation8 + $0x1c0] sm:$0xff]
    %v941 = vld [vmem:[#allocation8 + $0x1c8] sm:$0xff]
    %v942 = vld [vmem:[#allocation8 + $0x1d0] sm:$0xff]
    %v943 = vld [vmem:[#allocation8 + $0x1d8] sm:$0xff]
    %v944 = vld [vmem:[#allocation8 + $0x1e0] sm:$0xff]
    %v945 = vld [vmem:[#allocation8 + $0x1e8] sm:$0xff]
    %v946 = vld [vmem:[#allocation8 + $0x1f0] sm:$0xff]
    %v947 = vld [vmem:[#allocation8 + $0x1f8] sm:$0xff]
    %v948 = vld [vmem:[#allocation8 + $0x200] sm:$0xff]
    %v949 = vld [vmem:[#allocation8 + $0x208] sm:$0xff]
    %v950 = vld [vmem:[#allocation8 + $0x210] sm:$0xff]
    %v951 = vld [vmem:[#allocation8 + $0x218] sm:$0xff]
    %v952 = vld [vmem:[#allocation8 + $0x220] sm:$0xff]
    %v953 = vld [vmem:[#allocation8 + $0x228] sm:$0xff]
    %v954 = vld [vmem:[#allocation8 + $0x230] sm:$0xff]
    %v955 = vld [vmem:[#allocation8 + $0x238] sm:$0xff]
    %v956 = vld [vmem:[#allocation8 + $0x240] sm:$0xff]
    %v957 = vld [vmem:[#allocation8 + $0x248] sm:$0xff]
    %v958 = vld [vmem:[#allocation8 + $0x250] sm:$0xff]
    %v959 = vld [vmem:[#allocation8 + $0x258] sm:$0xff]
    %v960 = vld [vmem:[#allocation8 + $0x260] sm:$0xff]
    %v961 = vld [vmem:[#allocation8 + $0x268] sm:$0xff]
    %v962 = vld [vmem:[#allocation8 + $0x270] sm:$0xff]
    %v963 = vld [vmem:[#allocation8 + $0x278] sm:$0xff]
    %v964 = vld [vmem:[#allocation8 + $0x280] sm:$0xff]
    %v965 = vld [vmem:[#allocation8 + $0x288] sm:$0xff]
    %v966 = vld [vmem:[#allocation8 + $0x290] sm:$0xff]
    %v967 = vld [vmem:[#allocation8 + $0x298] sm:$0xff]
    %v968 = vld [vmem:[#allocation8 + $0x2a0] sm:$0xff]
    %v969 = vld [vmem:[#allocation8 + $0x2a8] sm:$0xff]
    %v970 = vld [vmem:[#allocation8 + $0x2b0] sm:$0xff]
    %v971 = vld [vmem:[#allocation8 + $0x2b8] sm:$0xff]
    %v972 = vld [vmem:[#allocation8 + $0x2c0] sm:$0xff]
    %v973 = vld [vmem:[#allocation8 + $0x2c8] sm:$0xff]
    %v974 = vld [vmem:[#allocation8 + $0x2d0] sm:$0xff]
    %v975 = vld [vmem:[#allocation8 + $0x2d8] sm:$0xff]
    %v976 = vld [vmem:[#allocation8 + $0x2e0] sm:$0xff]
    %v977 = vld [vmem:[#allocation8 + $0x2e8] sm:$0xff]
    %v978 = vld [vmem:[#allocation8 + $0x2f0] sm:$0xff]
    %v979 = vld [vmem:[#allocation8 + $0x2f8] sm:$0xff]
    %v980 = vld [vmem:[#allocation8 + $0x300] sm:$0xff]
    %v981 = vld [vmem:[#allocation8 + $0x308] sm:$0xff]
    %v982 = vld [vmem:[#allocation8 + $0x310] sm:$0xff]
    %v983 = vld [vmem:[#allocation8 + $0x318] sm:$0xff]
    %v984 = vld [vmem:[#allocation8 + $0x320] sm:$0xff]
    %v985 = vld [vmem:[#allocation8 + $0x328] sm:$0xff]
    %v986 = vld [vmem:[#allocation8 + $0x330] sm:$0xff]
    %v987 = vld [vmem:[#allocation8 + $0x338] sm:$0xff]
    %v988 = vld [vmem:[#allocation8 + $0x340] sm:$0xff]
    %v989 = vld [vmem:[#allocation8 + $0x348] sm:$0xff]
    %v990 = vld [vmem:[#allocation8 + $0x350] sm:$0xff]
    %v991 = vld [vmem:[#allocation8 + $0x358] sm:$0xff]
    %v992 = vld [vmem:[#allocation8 + $0x360] sm:$0xff]
    %v993 = vld [vmem:[#allocation8 + $0x368] sm:$0xff]
    %v994 = vld [vmem:[#allocation8 + $0x370] sm:$0xff]
    %v995 = vld [vmem:[#allocation8 + $0x378] sm:$0xff]
    %v996 = vld [vmem:[#allocation8 + $0x380] sm:$0xff]
    %v997 = vld [vmem:[#allocation8 + $0x388] sm:$0xff]
    %v998 = vld [vmem:[#allocation8 + $0x390] sm:$0xff]
    %v999 = vld [vmem:[#allocation8 + $0x398] sm:$0xff]
    %v1000 = vld [vmem:[#allocation8 + $0x3a0] sm:$0xff]
    %v1001 = vld [vmem:[#allocation8 + $0x3a8] sm:$0xff]
    %v1002 = vld [vmem:[#allocation8 + $0x3b0] sm:$0xff]
    %v1003 = vld [vmem:[#allocation8 + $0x3b8] sm:$0xff]
    %v1004 = vld [vmem:[#allocation8 + $0x3c0] sm:$0xff]
    %v1005 = vld [vmem:[#allocation8 + $0x3c8] sm:$0xff]
    %v1006 = vld [vmem:[#allocation8 + $0x3d0] sm:$0xff]
    %v1007 = vld [vmem:[#allocation8 + $0x3d8] sm:$0xff]
    %v1008 = vld [vmem:[#allocation8 + $0x3e0] sm:$0xff]
    %v1009 = vld [vmem:[#allocation8 + $0x3e8] sm:$0xff]
    %v1010 = vld [vmem:[#allocation8 + $0x3f0] sm:$0xff]
    %v1011 = vld [vmem:[#allocation8 + $0x3f8] sm:$0xff]
    %v1012 = vld [vmem:[#allocation8 + $0x400] sm:$0xff]
    %v1013 = vld [vmem:[#allocation8 + $0x408] sm:$0xff]
    %v1014 = vld [vmem:[#allocation8 + $0x410] sm:$0xff]
    %v1015 = vld [vmem:[#allocation8 + $0x418] sm:$0xff]
    %v1016 = vld [vmem:[#allocation8 + $0x420] sm:$0xff]
    %v1017 = vld [vmem:[#allocation8 + $0x428] sm:$0xff]
    %v1018 = vld [vmem:[#allocation8 + $0x430] sm:$0xff]
    %v1019 = vld [vmem:[#allocation8 + $0x438] sm:$0xff]
    %v1020 = vld [vmem:[#allocation8 + $0x440] sm:$0xff]
    %v1021 = vld [vmem:[#allocation8 + $0x448] sm:$0xff]
    %v1022 = vld [vmem:[#allocation8 + $0x450] sm:$0xff]
    %v1023 = vld [vmem:[#allocation8 + $0x458] sm:$0xff]
    %v1024 = vld [vmem:[#allocation8 + $0x460] sm:$0xff]
    %v1025 = vld [vmem:[#allocation8 + $0x468] sm:$0xff]
    %v1026 = vld [vmem:[#allocation8 + $0x470] sm:$0xff]
    %v1027 = vld [vmem:[#allocation8 + $0x478] sm:$0xff]
    %v1028 = vld [vmem:[#allocation8 + $0x480] sm:$0xff]
    %v1029 = vld [vmem:[#allocation8 + $0x488] sm:$0xff]
    %v1030 = vld [vmem:[#allocation8 + $0x490] sm:$0xff]
    %v1031 = vld [vmem:[#allocation8 + $0x498] sm:$0xff]
    %v1032 = vld [vmem:[#allocation8 + $0x4a0] sm:$0xff]
    %v1033 = vld [vmem:[#allocation8 + $0x4a8] sm:$0xff]
    %v1034 = vld [vmem:[#allocation8 + $0x4b0] sm:$0xff]
    %v1035 = vld [vmem:[#allocation8 + $0x4b8] sm:$0xff]
    %v1036 = vld [vmem:[#allocation8 + $0x4c0] sm:$0xff]
    %v1037 = vld [vmem:[#allocation8 + $0x4c8] sm:$0xff]
    %v1038 = vld [vmem:[#allocation8 + $0x4d0] sm:$0xff]
    %v1039 = vld [vmem:[#allocation8 + $0x4d8] sm:$0xff]
    %v1040 = vld [vmem:[#allocation8 + $0x4e0] sm:$0xff]
    %v1041 = vld [vmem:[#allocation8 + $0x4e8] sm:$0xff]
    %v1042 = vld [vmem:[#allocation8 + $0x4f0] sm:$0xff]
    %v1043 = vld [vmem:[#allocation8 + $0x4f8] sm:$0xff]
    %v1044 = vld [vmem:[#allocation8 + $0x500] sm:$0xff]
    %v1045 = vld [vmem:[#allocation8 + $0x508] sm:$0xff]
    %v1046 = vld [vmem:[#allocation8 + $0x510] sm:$0xff]
    %v1047 = vld [vmem:[#allocation8 + $0x518] sm:$0xff]
    %v1048 = vld [vmem:[#allocation8 + $0x520] sm:$0xff]
    %v1049 = vld [vmem:[#allocation8 + $0x528] sm:$0xff]
    %v1050 = vld [vmem:[#allocation8 + $0x530] sm:$0xff]
    %v1051 = vld [vmem:[#allocation8 + $0x538] sm:$0xff]
    %v1052 = vld [vmem:[#allocation8 + $0x540] sm:$0xff]
    %v1053 = vld [vmem:[#allocation8 + $0x548] sm:$0xff]
    %v1054 = vld [vmem:[#allocation8 + $0x550] sm:$0xff]
    %v1055 = vld [vmem:[#allocation8 + $0x558] sm:$0xff]
    %v1056 = vld [vmem:[#allocation8 + $0x560] sm:$0xff]
    %v1057 = vld [vmem:[#allocation8 + $0x568] sm:$0xff]
    %v1058 = vld [vmem:[#allocation8 + $0x570] sm:$0xff]
    %v1059 = vld [vmem:[#allocation8 + $0x578] sm:$0xff]
    %v1060 = vld [vmem:[#allocation8 + $0x580] sm:$0xff]
    %v1061 = vld [vmem:[#allocation8 + $0x588] sm:$0xff]
    %v1062 = vld [vmem:[#allocation8 + $0x590] sm:$0xff]
    %v1063 = vld [vmem:[#allocation8 + $0x598] sm:$0xff]
    %v1064 = vld [vmem:[#allocation8 + $0x5a0] sm:$0xff]
    %v1065 = vld [vmem:[#allocation8 + $0x5a8] sm:$0xff]
    %v1066 = vld [vmem:[#allocation8 + $0x5b0] sm:$0xff]
    %v1067 = vld [vmem:[#allocation8 + $0x5b8] sm:$0xff]
    %v1068 = vld [vmem:[#allocation8 + $0x5c0] sm:$0xff]
    %v1069 = vld [vmem:[#allocation8 + $0x5c8] sm:$0xff]
    %v1070 = vld [vmem:[#allocation8 + $0x5d0] sm:$0xff]
    %v1071 = vld [vmem:[#allocation8 + $0x5d8] sm:$0xff]
    %v1072 = vld [vmem:[#allocation8 + $0x5e0] sm:$0xff]
    %v1073 = vld [vmem:[#allocation8 + $0x5e8] sm:$0xff]
    %v1074 = vld [vmem:[#allocation8 + $0x5f0] sm:$0xff]
    %v1075 = vld [vmem:[#allocation8 + $0x5f8] sm:$0xff]
    %v1076 = vld [vmem:[#allocation8 + $0x600] sm:$0xff]
    %v1077 = vld [vmem:[#allocation8 + $0x608] sm:$0xff]
    %v1078 = vld [vmem:[#allocation8 + $0x610] sm:$0xff]
    %v1079 = vld [vmem:[#allocation8 + $0x618] sm:$0xff]
    %v1080 = vld [vmem:[#allocation8 + $0x620] sm:$0xff]
    %v1081 = vld [vmem:[#allocation8 + $0x628] sm:$0xff]
    %v1082 = vld [vmem:[#allocation8 + $0x630] sm:$0xff]
    %v1083 = vld [vmem:[#allocation8 + $0x638] sm:$0xff]
    %v1084 = vld [vmem:[#allocation8 + $0x640] sm:$0xff]
    %v1085 = vld [vmem:[#allocation8 + $0x648] sm:$0xff]
    %v1086 = vld [vmem:[#allocation8 + $0x650] sm:$0xff]
    %v1087 = vld [vmem:[#allocation8 + $0x658] sm:$0xff]
    %v1088 = vld [vmem:[#allocation8 + $0x660] sm:$0xff]
    %v1089 = vld [vmem:[#allocation8 + $0x668] sm:$0xff]
    %v1090 = vld [vmem:[#allocation8 + $0x670] sm:$0xff]
    %v1091 = vld [vmem:[#allocation8 + $0x678] sm:$0xff]
    %v1092 = vld [vmem:[#allocation8 + $0x680] sm:$0xff]
    %v1093 = vld [vmem:[#allocation8 + $0x688] sm:$0xff]
    %v1094 = vld [vmem:[#allocation8 + $0x690] sm:$0xff]
    %v1095 = vld [vmem:[#allocation8 + $0x698] sm:$0xff]
    %v1096 = vld [vmem:[#allocation8 + $0x6a0] sm:$0xff]
    %v1097 = vld [vmem:[#allocation8 + $0x6a8] sm:$0xff]
    %v1098 = vld [vmem:[#allocation8 + $0x6b0] sm:$0xff]
    %v1099 = vld [vmem:[#allocation8 + $0x6b8] sm:$0xff]
    %v1100 = vld [vmem:[#allocation8 + $0x6c0] sm:$0xff]
    %v1101 = vld [vmem:[#allocation8 + $0x6c8] sm:$0xff]
    %v1102 = vld [vmem:[#allocation8 + $0x6d0] sm:$0xff]
    %v1103 = vld [vmem:[#allocation8 + $0x6d8] sm:$0xff]
    %v1104 = vld [vmem:[#allocation8 + $0x6e0] sm:$0xff]
    %v1105 = vld [vmem:[#allocation8 + $0x6e8] sm:$0xff]
    %v1106 = vld [vmem:[#allocation8 + $0x6f0] sm:$0xff]
    %v1107 = vld [vmem:[#allocation8 + $0x6f8] sm:$0xff]
    %v1108 = vld [vmem:[#allocation8 + $0x700] sm:$0xff]
    %v1109 = vld [vmem:[#allocation8 + $0x708] sm:$0xff]
    %v1110 = vld [vmem:[#allocation8 + $0x710] sm:$0xff]
    %v1111 = vld [vmem:[#allocation8 + $0x718] sm:$0xff]
    %v1112 = vld [vmem:[#allocation8 + $0x720] sm:$0xff]
    %v1113 = vld [vmem:[#allocation8 + $0x728] sm:$0xff]
    %v1114 = vld [vmem:[#allocation8 + $0x730] sm:$0xff]
    %v1115 = vld [vmem:[#allocation8 + $0x738] sm:$0xff]
    %v1116 = vld [vmem:[#allocation8 + $0x740] sm:$0xff]
    %v1117 = vld [vmem:[#allocation8 + $0x748] sm:$0xff]
    %v1118 = vld [vmem:[#allocation8 + $0x750] sm:$0xff]
    %v1119 = vld [vmem:[#allocation8 + $0x758] sm:$0xff]
    %v1120 = vld [vmem:[#allocation8 + $0x760] sm:$0xff]
    %v1121 = vld [vmem:[#allocation8 + $0x768] sm:$0xff]
    %v1122 = vld [vmem:[#allocation8 + $0x770] sm:$0xff]
    %v1123 = vld [vmem:[#allocation8 + $0x778] sm:$0xff]
    %v1124 = vld [vmem:[#allocation8 + $0x780] sm:$0xff]
    %v1125 = vld [vmem:[#allocation8 + $0x788] sm:$0xff]
    %v1126 = vld [vmem:[#allocation8 + $0x790] sm:$0xff]
    %v1127 = vld [vmem:[#allocation8 + $0x798] sm:$0xff]
    %v1128 = vld [vmem:[#allocation8 + $0x7a0] sm:$0xff]
    %v1129 = vld [vmem:[#allocation8 + $0x7a8] sm:$0xff]
    %v1130 = vld [vmem:[#allocation8 + $0x7b0] sm:$0xff]
    %v1131 = vld [vmem:[#allocation8 + $0x7b8] sm:$0xff]
    %v1132 = vld [vmem:[#allocation8 + $0x7c0] sm:$0xff]
    %v1133 = vld [vmem:[#allocation8 + $0x7c8] sm:$0xff]
    %v1134 = vld [vmem:[#allocation8 + $0x7d0] sm:$0xff]
    %v1135 = vld [vmem:[#allocation8 + $0x7d8] sm:$0xff]
    %v1136 = vld [vmem:[#allocation8 + $0x7e0] sm:$0xff]
    %v1137 = vld [vmem:[#allocation8 + $0x7e8] sm:$0xff]
    %v1138 = vld [vmem:[#allocation8 + $0x7f0] sm:$0xff]
    %v1139 = vld [vmem:[#allocation8 + $0x7f8] sm:$0xff]
    %v1140 = vld [vmem:[#allocation8 + $0x800] sm:$0xff]
    %v1141 = vld [vmem:[#allocation8 + $0x808] sm:$0xff]
    %v1142 = vld [vmem:[#allocation8 + $0x810] sm:$0xff]
    %v1143 = vld [vmem:[#allocation8 + $0x818] sm:$0xff]
    %v1144 = vld [vmem:[#allocation8 + $0x820] sm:$0xff]
    %v1145 = vld [vmem:[#allocation8 + $0x828] sm:$0xff]
    %v1146 = vld [vmem:[#allocation8 + $0x830] sm:$0xff]
    %v1147 = vld [vmem:[#allocation8 + $0x838] sm:$0xff]
    %v1148 = vld [vmem:[#allocation8 + $0x840] sm:$0xff]
    %v1149 = vld [vmem:[#allocation8 + $0x848] sm:$0xff]
    %v1150 = vld [vmem:[#allocation8 + $0x850] sm:$0xff]
    %v1151 = vld [vmem:[#allocation8 + $0x858] sm:$0xff]
    %v1152 = vld [vmem:[#allocation8 + $0x860] sm:$0xff]
    %v1153 = vld [vmem:[#allocation8 + $0x868] sm:$0xff]
    %v1154 = vld [vmem:[#allocation8 + $0x870] sm:$0xff]
    %v1155 = vld [vmem:[#allocation8 + $0x878] sm:$0xff]
    %v1156 = vld [vmem:[#allocation8 + $0x880] sm:$0xff]
    %v1157 = vld [vmem:[#allocation8 + $0x888] sm:$0xff]
    %v1158 = vld [vmem:[#allocation8 + $0x890] sm:$0xff]
    %v1159 = vld [vmem:[#allocation8 + $0x898] sm:$0xff]
    %v1160 = vld [vmem:[#allocation8 + $0x8a0] sm:$0xff]
    %v1161 = vld [vmem:[#allocation8 + $0x8a8] sm:$0xff]
    %v1162 = vld [vmem:[#allocation8 + $0x8b0] sm:$0xff]
    %v1163 = vld [vmem:[#allocation8 + $0x8b8] sm:$0xff]
    %v1164 = vld [vmem:[#allocation8 + $0x8c0] sm:$0xff]
    %v1165 = vld [vmem:[#allocation8 + $0x8c8] sm:$0xff]
    %v1166 = vld [vmem:[#allocation8 + $0x8d0] sm:$0xff]
    %v1167 = vld [vmem:[#allocation8 + $0x8d8] sm:$0xff]
    %v1168 = vld [vmem:[#allocation8 + $0x8e0] sm:$0xff]
    %v1169 = vld [vmem:[#allocation8 + $0x8e8] sm:$0xff]
    %v1170 = vld [vmem:[#allocation8 + $0x8f0] sm:$0xff]
    %v1171 = vld [vmem:[#allocation8 + $0x8f8] sm:$0xff]
    %v1172 = vld [vmem:[#allocation10] sm:$0x3f]
    %v1174 = vlaneseq
    %v1175 = vshrl.u32 %v1174, 7
    %v1176 = vsub.s32 0, %v1175
    %v1177 = vrot.slane %v1172, %v1176
    %v1178 = vlaneseq
    %v1179 = vshrl.u32 %v1178, 7
    %v1180 = vsub.s32 1, %v1179
    %v1181 = vrot.slane %v1172, %v1180
    %v1182 = vlaneseq
    %v1183 = vshrl.u32 %v1182, 7
    %v1184 = vsub.s32 2, %v1183
    %v1185 = vrot.slane %v1172, %v1184
    %v1186 = vlaneseq
    %v1187 = vshrl.u32 %v1186, 7
    %v1188 = vsub.s32 3, %v1187
    %v1189 = vrot.slane %v1172, %v1188
    %v1190 = vlaneseq
    %v1191 = vshrl.u32 %v1190, 7
    %v1192 = vsub.s32 4, %v1191
    %v1193 = vrot.slane %v1172, %v1192
    %v1194 = vlaneseq
    %v1195 = vshrl.u32 %v1194, 7
    %v1196 = vsub.s32 5, %v1195
    %v1197 = vrot.slane %v1172, %v1196
    %1204 = vmatprep.subr.mxu0 %v885
    %1205 = vmatpush1.msra.mxu0 %v884
    %1206 = vmatprep.subr.mxu0 %v891
    %1207 = vmatpush1.msra.mxu0 %v890
    %1208 = vmatprep.subr.mxu0 %v897
    %1209 = vmatpush1.msra.mxu0 %v896
    %1210 = vmatprep.subr.mxu0 %v903
    %1211 = vmatpush1.msra.mxu0 %v902
    %1212 = vmatprep.subr.mxu0 %v909
    %1213 = vmatpush1.msra.mxu0 %v908
    %1214 = vmatprep.subr.mxu0 %v915
    %1215 = vmatpush1.msra.mxu0 %v914
    %1216 = vmatprep.subr.mxu0 %v921
    %1217 = vmatpush1.msra.mxu0 %v920
    %1218 = vmatprep.subr.mxu0 %v927
    %1219 = vmatpush1.msra.mxu0 %v926
    %1220 = vmatprep.subr.mxu0 %v933
    %1221 = vmatpush1.msra.mxu0 %v932
    %1222 = vmatprep.subr.mxu0 %v939
    %1223 = vmatpush1.msra.mxu0 %v938
    %1224 = vmatprep.subr.mxu0 %v945
    %1225 = vmatpush1.msra.mxu0 %v944
    %1226 = vmatprep.subr.mxu0 %v951
    %1227 = vmatpush1.msra.mxu0 %v950
    %1228 = vmatprep.subr.mxu0 %v957
    %1229 = vmatpush1.msra.mxu0 %v956
    %1230 = vmatprep.subr.mxu0 %v963
    %1231 = vmatpush1.msra.mxu0 %v962
    %1232 = vmatprep.subr.mxu0 %v969
    %1233 = vmatpush1.msra.mxu0 %v968
    %1234 = vmatprep.subr.mxu0 %v975
    %1235 = vmatpush1.msra.mxu0 %v974
    %1236 = vmatprep.subr.mxu0 %v981
    %1237 = vmatpush1.msra.mxu0 %v980
    %1238 = vmatprep.subr.mxu0 %v987
    %1239 = vmatpush1.msra.mxu0 %v986
    %1240 = vmatprep.subr.mxu0 %v993
    %1241 = vmatpush1.msra.mxu0 %v992
    %1242 = vmatprep.subr.mxu0 %v999
    %1243 = vmatpush1.msra.mxu0 %v998
    %1244 = vmatprep.subr.mxu0 %v1005
    %1245 = vmatpush1.msra.mxu0 %v1004
    %1246 = vmatprep.subr.mxu0 %v1011
    %1247 = vmatpush1.msra.mxu0 %v1010
    %1248 = vmatprep.subr.mxu0 %v1017
    %1249 = vmatpush1.msra.mxu0 %v1016
    %1250 = vmatprep.subr.mxu0 %v1023
    %1251 = vmatpush1.msra.mxu0 %v1022
    %1252 = vmatprep.subr.mxu0 %v1029
    %1253 = vmatpush1.msra.mxu0 %v1028
    %1254 = vmatprep.subr.mxu0 %v1035
    %1255 = vmatpush1.msra.mxu0 %v1034
    %1256 = vmatprep.subr.mxu0 %v1041
    %1257 = vmatpush1.msra.mxu0 %v1040
    %1258 = vmatprep.subr.mxu0 %v1047
    %1259 = vmatpush1.msra.mxu0 %v1046
    %1260 = vmatprep.subr.mxu0 %v1053
    %1261 = vmatpush1.msra.mxu0 %v1052
    %1262 = vmatprep.subr.mxu0 %v1059
    %1263 = vmatpush1.msra.mxu0 %v1058
    %1264 = vmatprep.subr.mxu0 %v1065
    %1265 = vmatpush1.msra.mxu0 %v1064
    %1266 = vmatprep.subr.mxu0 %v1071
    %1267 = vmatpush1.msra.mxu0 %v1070
    %1268 = vmatprep.mubr.f32.mxu0 %v882
    %1269 = vmatmul.mubr.f32.gmra.mrb[0].mxu0 %v881
    %v1270 = vpop.f32.mrb[0].mxu0
    %v1271 = vadd.f32 %v1177, %v1270
    %v1272 = vpop.f32.mrb[0].mxu0
    %v1273 = vadd.f32 %v1181, %v1272
    %1274 = vdwg.mxu0
    %1275 = vmatprep.subr.mxu0 %v1077
    %1276 = vmatpush1.msra.mxu0 %v1076
    %1277 = vmatprep.subr.mxu0 %v1083
    %1278 = vmatpush1.msra.mxu0 %v1082
    %1279 = vmatprep.subr.mxu0 %v1089
    %1280 = vmatpush1.msra.mxu0 %v1088
    %1281 = vmatprep.subr.mxu0 %v1095
    %1282 = vmatpush1.msra.mxu0 %v1094
    %1283 = vmatprep.subr.mxu0 %v1101
    %1284 = vmatpush1.msra.mxu0 %v1100
    %1285 = vmatprep.subr.mxu0 %v1107
    %1286 = vmatpush1.msra.mxu0 %v1106
    %1287 = vmatprep.subr.mxu0 %v1113
    %1288 = vmatpush1.msra.mxu0 %v1112
    %1289 = vmatprep.subr.mxu0 %v1119
    %1290 = vmatpush1.msra.mxu0 %v1118
    %1291 = vmatprep.subr.mxu0 %v1125
    %1292 = vmatpush1.msra.mxu0 %v1124
    %1293 = vmatprep.subr.mxu0 %v1131
    %1294 = vmatpush1.msra.mxu0 %v1130
    %1295 = vmatprep.subr.mxu0 %v1137
    %1296 = vmatpush1.msra.mxu0 %v1136
    %1297 = vmatprep.subr.mxu0 %v1143
    %1298 = vmatpush1.msra.mxu0 %v1142
    %1299 = vmatprep.subr.mxu0 %v1149
    %1300 = vmatpush1.msra.mxu0 %v1148
    %1301 = vmatprep.subr.mxu0 %v1155
    %1302 = vmatpush1.msra.mxu0 %v1154
    %1303 = vmatprep.subr.mxu0 %v1161
    %1304 = vmatpush1.msra.mxu0 %v1160
    %1305 = vmatprep.subr.mxu0 %v1167
    %1306 = vmatpush1.msra.mxu0 %v1166
    %1307 = vmatprep.subr.mxu0 0.0
    %1308 = vmatpush1.msra.mxu0 0.0
    %1309 = vmatprep.subr.mxu0 0.0
    %1310 = vmatpush1.msra.mxu0 0.0
    %1311 = vmatprep.subr.mxu0 0.0
    %1312 = vmatpush1.msra.mxu0 0.0
    %1313 = vmatprep.subr.mxu0 0.0
    %1314 = vmatpush1.msra.mxu0 0.0
    %1315 = vmatprep.subr.mxu0 0.0
    %1316 = vmatpush1.msra.mxu0 0.0
    %1317 = vmatprep.subr.mxu0 0.0
    %1318 = vmatpush1.msra.mxu0 0.0
    %1319 = vmatprep.subr.mxu0 0.0
    %1320 = vmatpush1.msra.mxu0 0.0
    %1321 = vmatprep.subr.mxu0 0.0
    %1322 = vmatpush1.msra.mxu0 0.0
    %1323 = vmatprep.subr.mxu0 0.0
    %1324 = vmatpush1.msra.mxu0 0.0
    %1325 = vmatprep.subr.mxu0 0.0
    %1326 = vmatpush1.msra.mxu0 0.0
    %1327 = vmatprep.subr.mxu0 0.0
    %1328 = vmatpush1.msra.mxu0 0.0
    %1329 = vmatprep.subr.mxu0 0.0
    %1330 = vmatpush1.msra.mxu0 0.0
    %1331 = vmatprep.subr.mxu0 0.0
    %1332 = vmatpush1.msra.mxu0 0.0
    %1333 = vmatprep.subr.mxu0 0.0
    %1334 = vmatpush1.msra.mxu0 0.0
    %1335 = vmatprep.subr.mxu0 0.0
    %1336 = vmatpush1.msra.mxu0 0.0
    %1337 = vmatprep.subr.mxu0 0.0
    %1338 = vmatpush1.msra.mxu0 0.0
    %1339 = vmatprep.mubr.f32.mxu0 0.0
    %1340 = vmatmul.mubr.f32.gmra.mrb[0].mxu0 %v883
    %v1341 = vpop.f32.mrb[0].mxu0
    %v1342 = vadd.f32 %v1271, %v1341
    %v1343 = vpop.f32.mrb[0].mxu0
    %v1344 = vadd.f32 %v1273, %v1343
    %1345 = vdwg.mxu0
    %1346 = vmatprep.subr.mxu0 %v887
    %1347 = vmatpush1.msra.mxu0 %v886
    %1348 = vmatprep.subr.mxu0 %v893
    %1349 = vmatpush1.msra.mxu0 %v892
    %1350 = vmatprep.subr.mxu0 %v899
    %1351 = vmatpush1.msra.mxu0 %v898
    %1352 = vmatprep.subr.mxu0 %v905
    %1353 = vmatpush1.msra.mxu0 %v904
    %1354 = vmatprep.subr.mxu0 %v911
    %1355 = vmatpush1.msra.mxu0 %v910
    %1356 = vmatprep.subr.mxu0 %v917
    %1357 = vmatpush1.msra.mxu0 %v916
    %1358 = vmatprep.subr.mxu0 %v923
    %1359 = vmatpush1.msra.mxu0 %v922
    %1360 = vmatprep.subr.mxu0 %v929
    %1361 = vmatpush1.msra.mxu0 %v928
    %1362 = vmatprep.subr.mxu0 %v935
    %1363 = vmatpush1.msra.mxu0 %v934
    %1364 = vmatprep.subr.mxu0 %v941
    %1365 = vmatpush1.msra.mxu0 %v940
    %1366 = vmatprep.subr.mxu0 %v947
    %1367 = vmatpush1.msra.mxu0 %v946
    %1368 = vmatprep.subr.mxu0 %v953
    %1369 = vmatpush1.msra.mxu0 %v952
    %1370 = vmatprep.subr.mxu0 %v959
    %1371 = vmatpush1.msra.mxu0 %v958
    %1372 = vmatprep.subr.mxu0 %v965
    %1373 = vmatpush1.msra.mxu0 %v964
    %1374 = vmatprep.subr.mxu0 %v971
    %1375 = vmatpush1.msra.mxu0 %v970
    %1376 = vmatprep.subr.mxu0 %v977
    %1377 = vmatpush1.msra.mxu0 %v976
    %1378 = vmatprep.subr.mxu0 %v983
    %1379 = vmatpush1.msra.mxu0 %v982
    %1380 = vmatprep.subr.mxu0 %v989
    %1381 = vmatpush1.msra.mxu0 %v988
    %1382 = vmatprep.subr.mxu0 %v995
    %1383 = vmatpush1.msra.mxu0 %v994
    %1384 = vmatprep.subr.mxu0 %v1001
    %1385 = vmatpush1.msra.mxu0 %v1000
    %1386 = vmatprep.subr.mxu0 %v1007
    %1387 = vmatpush1.msra.mxu0 %v1006
    %1388 = vmatprep.subr.mxu0 %v1013
    %1389 = vmatpush1.msra.mxu0 %v1012
    %1390 = vmatprep.subr.mxu0 %v1019
    %1391 = vmatpush1.msra.mxu0 %v1018
    %1392 = vmatprep.subr.mxu0 %v1025
    %1393 = vmatpush1.msra.mxu0 %v1024
    %1394 = vmatprep.subr.mxu0 %v1031
    %1395 = vmatpush1.msra.mxu0 %v1030
    %1396 = vmatprep.subr.mxu0 %v1037
    %1397 = vmatpush1.msra.mxu0 %v1036
    %1398 = vmatprep.subr.mxu0 %v1043
    %1399 = vmatpush1.msra.mxu0 %v1042
    %1400 = vmatprep.subr.mxu0 %v1049
    %1401 = vmatpush1.msra.mxu0 %v1048
    %1402 = vmatprep.subr.mxu0 %v1055
    %1403 = vmatpush1.msra.mxu0 %v1054
    %1404 = vmatprep.subr.mxu0 %v1061
    %1405 = vmatpush1.msra.mxu0 %v1060
    %1406 = vmatprep.subr.mxu0 %v1067
    %1407 = vmatpush1.msra.mxu0 %v1066
    %1408 = vmatprep.subr.mxu0 %v1073
    %1409 = vmatpush1.msra.mxu0 %v1072
    %1410 = vmatprep.mubr.f32.mxu0 %v882
    %1411 = vmatmul.mubr.f32.gmra.mrb[0].mxu0 %v881
    %v1412 = vpop.f32.mrb[0].mxu0
    %v1413 = vadd.f32 %v1185, %v1412
    %v1414 = vpop.f32.mrb[0].mxu0
    %v1415 = vadd.f32 %v1189, %v1414
    %1416 = vdwg.mxu0
    %1417 = vmatprep.subr.mxu0 %v1079
    %1418 = vmatpush1.msra.mxu0 %v1078
    %1419 = vmatprep.subr.mxu0 %v1085
    %1420 = vmatpush1.msra.mxu0 %v1084
    %1421 = vmatprep.subr.mxu0 %v1091
    %1422 = vmatpush1.msra.mxu0 %v1090
    %1423 = vmatprep.subr.mxu0 %v1097
    %1424 = vmatpush1.msra.mxu0 %v1096
    %1425 = vmatprep.subr.mxu0 %v1103
    %1426 = vmatpush1.msra.mxu0 %v1102
    %1427 = vmatprep.subr.mxu0 %v1109
    %1428 = vmatpush1.msra.mxu0 %v1108
    %1429 = vmatprep.subr.mxu0 %v1115
    %1430 = vmatpush1.msra.mxu0 %v1114
    %1431 = vmatprep.subr.mxu0 %v1121
    %1432 = vmatpush1.msra.mxu0 %v1120
    %1433 = vmatprep.subr.mxu0 %v1127
    %1434 = vmatpush1.msra.mxu0 %v1126
    %1435 = vmatprep.subr.mxu0 %v1133
    %1436 = vmatpush1.msra.mxu0 %v1132
    %1437 = vmatprep.subr.mxu0 %v1139
    %1438 = vmatpush1.msra.mxu0 %v1138
    %1439 = vmatprep.subr.mxu0 %v1145
    %1440 = vmatpush1.msra.mxu0 %v1144
    %1441 = vmatprep.subr.mxu0 %v1151
    %1442 = vmatpush1.msra.mxu0 %v1150
    %1443 = vmatprep.subr.mxu0 %v1157
    %1444 = vmatpush1.msra.mxu0 %v1156
    %1445 = vmatprep.subr.mxu0 %v1163
    %1446 = vmatpush1.msra.mxu0 %v1162
    %1447 = vmatprep.subr.mxu0 %v1169
    %1448 = vmatpush1.msra.mxu0 %v1168
    %1449 = vmatprep.subr.mxu0 0.0
    %1450 = vmatpush1.msra.mxu0 0.0
    %1451 = vmatprep.subr.mxu0 0.0
    %1452 = vmatpush1.msra.mxu0 0.0
    %1453 = vmatprep.subr.mxu0 0.0
    %1454 = vmatpush1.msra.mxu0 0.0
    %1455 = vmatprep.subr.mxu0 0.0
    %1456 = vmatpush1.msra.mxu0 0.0
    %1457 = vmatprep.subr.mxu0 0.0
    %1458 = vmatpush1.msra.mxu0 0.0
    %1459 = vmatprep.subr.mxu0 0.0
    %1460 = vmatpush1.msra.mxu0 0.0
    %1461 = vmatprep.subr.mxu0 0.0
    %1462 = vmatpush1.msra.mxu0 0.0
    %1463 = vmatprep.subr.mxu0 0.0
    %1464 = vmatpush1.msra.mxu0 0.0
    %1465 = vmatprep.subr.mxu0 0.0
    %1466 = vmatpush1.msra.mxu0 0.0
    %1467 = vmatprep.subr.mxu0 0.0
    %1468 = vmatpush1.msra.mxu0 0.0
    %1469 = vmatprep.subr.mxu0 0.0
    %1470 = vmatpush1.msra.mxu0 0.0
    %1471 = vmatprep.subr.mxu0 0.0
    %1472 = vmatpush1.msra.mxu0 0.0
    %1473 = vmatprep.subr.mxu0 0.0
    %1474 = vmatpush1.msra.mxu0 0.0
    %1475 = vmatprep.subr.mxu0 0.0
    %1476 = vmatpush1.msra.mxu0 0.0
    %1477 = vmatprep.subr.mxu0 0.0
    %1478 = vmatpush1.msra.mxu0 0.0
    %1479 = vmatprep.subr.mxu0 0.0
    %1480 = vmatpush1.msra.mxu0 0.0
    %1481 = vmatprep.mubr.f32.mxu0 0.0
    %1482 = vmatmul.mubr.f32.gmra.mrb[0].mxu0 %v883
    %v1483 = vpop.f32.mrb[0].mxu0
    %v1484 = vadd.f32 %v1413, %v1483
    %v1485 = vpop.f32.mrb[0].mxu0
    %v1486 = vadd.f32 %v1415, %v1485
    %1487 = vdwg.mxu0
    %1488 = vmatprep.subr.mxu0 %v889
    %1489 = vmatpush1.msra.mxu0 %v888
    %1490 = vmatprep.subr.mxu0 %v895
    %1491 = vmatpush1.msra.mxu0 %v894
    %1492 = vmatprep.subr.mxu0 %v901
    %1493 = vmatpush1.msra.mxu0 %v900
    %1494 = vmatprep.subr.mxu0 %v907
    %1495 = vmatpush1.msra.mxu0 %v906
    %1496 = vmatprep.subr.mxu0 %v913
    %1497 = vmatpush1.msra.mxu0 %v912
    %1498 = vmatprep.subr.mxu0 %v919
    %1499 = vmatpush1.msra.mxu0 %v918
    %1500 = vmatprep.subr.mxu0 %v925
    %1501 = vmatpush1.msra.mxu0 %v924
    %1502 = vmatprep.subr.mxu0 %v931
    %1503 = vmatpush1.msra.mxu0 %v930
    %1504 = vmatprep.subr.mxu0 %v937
    %1505 = vmatpush1.msra.mxu0 %v936
    %1506 = vmatprep.subr.mxu0 %v943
    %1507 = vmatpush1.msra.mxu0 %v942
    %1508 = vmatprep.subr.mxu0 %v949
    %1509 = vmatpush1.msra.mxu0 %v948
    %1510 = vmatprep.subr.mxu0 %v955
    %1511 = vmatpush1.msra.mxu0 %v954
    %1512 = vmatprep.subr.mxu0 %v961
    %1513 = vmatpush1.msra.mxu0 %v960
    %1514 = vmatprep.subr.mxu0 %v967
    %1515 = vmatpush1.msra.mxu0 %v966
    %1516 = vmatprep.subr.mxu0 %v973
    %1517 = vmatpush1.msra.mxu0 %v972
    %1518 = vmatprep.subr.mxu0 %v979
    %1519 = vmatpush1.msra.mxu0 %v978
    %1520 = vmatprep.subr.mxu0 %v985
    %1521 = vmatpush1.msra.mxu0 %v984
    %1522 = vmatprep.subr.mxu0 %v991
    %1523 = vmatpush1.msra.mxu0 %v990
    %1524 = vmatprep.subr.mxu0 %v997
    %1525 = vmatpush1.msra.mxu0 %v996
    %1526 = vmatprep.subr.mxu0 %v1003
    %1527 = vmatpush1.msra.mxu0 %v1002
    %1528 = vmatprep.subr.mxu0 %v1009
    %1529 = vmatpush1.msra.mxu0 %v1008
    %1530 = vmatprep.subr.mxu0 %v1015
    %1531 = vmatpush1.msra.mxu0 %v1014
    %1532 = vmatprep.subr.mxu0 %v1021
    %1533 = vmatpush1.msra.mxu0 %v1020
    %1534 = vmatprep.subr.mxu0 %v1027
    %1535 = vmatpush1.msra.mxu0 %v1026
    %1536 = vmatprep.subr.mxu0 %v1033
    %1537 = vmatpush1.msra.mxu0 %v1032
    %1538 = vmatprep.subr.mxu0 %v1039
    %1539 = vmatpush1.msra.mxu0 %v1038
    %1540 = vmatprep.subr.mxu0 %v1045
    %1541 = vmatpush1.msra.mxu0 %v1044
    %1542 = vmatprep.subr.mxu0 %v1051
    %1543 = vmatpush1.msra.mxu0 %v1050
    %1544 = vmatprep.subr.mxu0 %v1057
    %1545 = vmatpush1.msra.mxu0 %v1056
    %1546 = vmatprep.subr.mxu0 %v1063
    %1547 = vmatpush1.msra.mxu0 %v1062
    %1548 = vmatprep.subr.mxu0 %v1069
    %1549 = vmatpush1.msra.mxu0 %v1068
    %1550 = vmatprep.subr.mxu0 %v1075
    %1551 = vmatpush1.msra.mxu0 %v1074
    %1552 = vmatprep.mubr.f32.mxu0 %v882
    %1553 = vmatmul.mubr.f32.gmra.mrb[0].mxu0 %v881
    %v1554 = vpop.f32.mrb[0].mxu0
    %v1555 = vadd.f32 %v1193, %v1554
    %v1556 = vpop.f32.mrb[0].mxu0
    %v1557 = vadd.f32 %v1197, %v1556
    %1558 = vdwg.mxu0
    %1559 = vmatprep.subr.mxu0 %v1081
    %1560 = vmatpush1.msra.mxu0 %v1080
    %1561 = vmatprep.subr.mxu0 %v1087
    %1562 = vmatpush1.msra.mxu0 %v1086
    %1563 = vmatprep.subr.mxu0 %v1093
    %1564 = vmatpush1.msra.mxu0 %v1092
    %1565 = vmatprep.subr.mxu0 %v1099
    %1566 = vmatpush1.msra.mxu0 %v1098
    %1567 = vmatprep.subr.mxu0 %v1105
    %1568 = vmatpush1.msra.mxu0 %v1104
    %1569 = vmatprep.subr.mxu0 %v1111
    %1570 = vmatpush1.msra.mxu0 %v1110
    %1571 = vmatprep.subr.mxu0 %v1117
    %1572 = vmatpush1.msra.mxu0 %v1116
    %1573 = vmatprep.subr.mxu0 %v1123
    %1574 = vmatpush1.msra.mxu0 %v1122
    %1575 = vmatprep.subr.mxu0 %v1129
    %1576 = vmatpush1.msra.mxu0 %v1128
    %1577 = vmatprep.subr.mxu0 %v1135
    %1578 = vmatpush1.msra.mxu0 %v1134
    %1579 = vmatprep.subr.mxu0 %v1141
    %1580 = vmatpush1.msra.mxu0 %v1140
    %1581 = vmatprep.subr.mxu0 %v1147
    %1582 = vmatpush1.msra.mxu0 %v1146
    %1583 = vmatprep.subr.mxu0 %v1153
    %1584 = vmatpush1.msra.mxu0 %v1152
    %1585 = vmatprep.subr.mxu0 %v1159
    %1586 = vmatpush1.msra.mxu0 %v1158
    %1587 = vmatprep.subr.mxu0 %v1165
    %1588 = vmatpush1.msra.mxu0 %v1164
    %1589 = vmatprep.subr.mxu0 %v1171
    %1590 = vmatpush1.msra.mxu0 %v1170
    %1591 = vmatprep.subr.mxu0 0.0
    %1592 = vmatpush1.msra.mxu0 0.0
    %1593 = vmatprep.subr.mxu0 0.0
    %1594 = vmatpush1.msra.mxu0 0.0
    %1595 = vmatprep.subr.mxu0 0.0
    %1596 = vmatpush1.msra.mxu0 0.0
    %1597 = vmatprep.subr.mxu0 0.0
    %1598 = vmatpush1.msra.mxu0 0.0
    %1599 = vmatprep.subr.mxu0 0.0
    %1600 = vmatpush1.msra.mxu0 0.0
    %1601 = vmatprep.subr.mxu0 0.0
    %1602 = vmatpush1.msra.mxu0 0.0
    %1603 = vmatprep.subr.mxu0 0.0
    %1604 = vmatpush1.msra.mxu0 0.0
    %1605 = vmatprep.subr.mxu0 0.0
    %1606 = vmatpush1.msra.mxu0 0.0
    %1607 = vmatprep.subr.mxu0 0.0
    %1608 = vmatpush1.msra.mxu0 0.0
    %1609 = vmatprep.subr.mxu0 0.0
    %1610 = vmatpush1.msra.mxu0 0.0
    %1611 = vmatprep.subr.mxu0 0.0
    %1612 = vmatpush1.msra.mxu0 0.0
    %1613 = vmatprep.subr.mxu0 0.0
    %1614 = vmatpush1.msra.mxu0 0.0
    %1615 = vmatprep.subr.mxu0 0.0
    %1616 = vmatpush1.msra.mxu0 0.0
    %1617 = vmatprep.subr.mxu0 0.0
    %1618 = vmatpush1.msra.mxu0 0.0
    %1619 = vmatprep.subr.mxu0 0.0
    %1620 = vmatpush1.msra.mxu0 0.0
    %1621 = vmatprep.subr.mxu0 0.0
    %1622 = vmatpush1.msra.mxu0 0.0
    %1623 = vmatprep.mubr.f32.mxu0 0.0
    %1624 = vmatmul.mubr.f32.gmra.mrb[0].mxu0 %v883
    %v1625 = vpop.f32.mrb[0].mxu0
    %v1626 = vadd.f32 %v1555, %v1625
    %v1627 = vpop.f32.mrb[0].mxu0
    %v1628 = vadd.f32 %v1557, %v1627
    %1629 = vdwg.mxu0
    %v1630 = vmax.f32 %v1342, 0.0
    %v1631 = vmax.f32 %v1344, 0.0
    %v1632 = vmax.f32 %v1484, 0.0
    %v1633 = vmax.f32 %v1486, 0.0
    %v1634 = vmax.f32 %v1626, 0.0
    %v1635 = vmax.f32 %v1628, 0.0
    %v1636 = vmax.f32 %v1630, %v1632
    %v1637 = vmax.f32 %v1631, %v1633
    %v1638 = vmax.f32 %v1636, %v1634
    %v1639 = vmax.f32 %v1637, %v1635
    %v1640 = vld [vmem:[#allocation11] sm:$0xff]
    %v1641 = vld [vmem:[#allocation11 + $0x8] sm:$0xff]
    %v1642 = vld [vmem:[#allocation11 + $0x10] sm:$0xff]
    %v1643 = vld [vmem:[#allocation11 + $0x18] sm:$0xff]
    %v1644 = vld [vmem:[#allocation11 + $0x20] sm:$0xff]
    %v1645 = vld [vmem:[#allocation11 + $0x28] sm:$0xff]
    %v1646 = vld [vmem:[#allocation11 + $0x30] sm:$0xff]
    %v1647 = vld [vmem:[#allocation11 + $0x38] sm:$0xff]
    %v1648 = vld [vmem:[#allocation11 + $0x40] sm:$0xff]
    %v1649 = vld [vmem:[#allocation11 + $0x48] sm:$0xff]
    %v1650 = vld [vmem:[#allocation11 + $0x50] sm:$0xff]
    %v1651 = vld [vmem:[#allocation11 + $0x58] sm:$0xff]
    %v1652 = vld [vmem:[#allocation11 + $0x60] sm:$0xff]
    %v1653 = vld [vmem:[#allocation11 + $0x68] sm:$0xff]
    %v1654 = vld [vmem:[#allocation11 + $0x70] sm:$0xff]
    %v1655 = vld [vmem:[#allocation11 + $0x78] sm:$0xff]
    %v1656 = vld [vmem:[#allocation11 + $0x80] sm:$0xff]
    %v1657 = vld [vmem:[#allocation11 + $0x88] sm:$0xff]
    %v1658 = vld [vmem:[#allocation11 + $0x90] sm:$0xff]
    %v1659 = vld [vmem:[#allocation11 + $0x98] sm:$0xff]
    %v1660 = vld [vmem:[#allocation11 + $0xa0] sm:$0xff]
    %v1661 = vld [vmem:[#allocation11 + $0xa8] sm:$0xff]
    %v1662 = vld [vmem:[#allocation11 + $0xb0] sm:$0xff]
    %v1663 = vld [vmem:[#allocation11 + $0xb8] sm:$0xff]
    %v1664 = vld [vmem:[#allocation11 + $0xc0] sm:$0xff]
    %v1665 = vld [vmem:[#allocation11 + $0xc8] sm:$0xff]
    %v1666 = vld [vmem:[#allocation11 + $0xd0] sm:$0xff]
    %v1667 = vld [vmem:[#allocation11 + $0xd8] sm:$0xff]
    %v1668 = vld [vmem:[#allocation11 + $0xe0] sm:$0xff]
    %v1669 = vld [vmem:[#allocation11 + $0xe8] sm:$0xff]
    %v1670 = vld [vmem:[#allocation11 + $0xf0] sm:$0xff]
    %v1671 = vld [vmem:[#allocation11 + $0xf8] sm:$0xff]
    %v1672 = vld [vmem:[#allocation11 + $0x100] sm:$0xff]
    %v1673 = vld [vmem:[#allocation11 + $0x108] sm:$0xff]
    %v1674 = vld [vmem:[#allocation11 + $0x110] sm:$0xff]
    %v1675 = vld [vmem:[#allocation11 + $0x118] sm:$0xff]
    %v1676 = vld [vmem:[#allocation11 + $0x120] sm:$0xff]
    %v1677 = vld [vmem:[#allocation11 + $0x128] sm:$0xff]
    %v1678 = vld [vmem:[#allocation11 + $0x130] sm:$0xff]
    %v1679 = vld [vmem:[#allocation11 + $0x138] sm:$0xff]
    %v1680 = vld [vmem:[#allocation11 + $0x140] sm:$0xff]
    %v1681 = vld [vmem:[#allocation11 + $0x148] sm:$0xff]
    %v1682 = vld [vmem:[#allocation11 + $0x150] sm:$0xff]
    %v1683 = vld [vmem:[#allocation11 + $0x158] sm:$0xff]
    %v1684 = vld [vmem:[#allocation11 + $0x160] sm:$0xff]
    %v1685 = vld [vmem:[#allocation11 + $0x168] sm:$0xff]
    %v1686 = vld [vmem:[#allocation11 + $0x170] sm:$0xff]
    %v1687 = vld [vmem:[#allocation11 + $0x178] sm:$0xff]
    %v1688 = vld [vmem:[#allocation11 + $0x180] sm:$0xff]
    %v1689 = vld [vmem:[#allocation11 + $0x188] sm:$0xff]
    %v1690 = vld [vmem:[#allocation11 + $0x190] sm:$0xff]
    %v1691 = vld [vmem:[#allocation11 + $0x198] sm:$0xff]
    %v1692 = vld [vmem:[#allocation11 + $0x1a0] sm:$0xff]
    %v1693 = vld [vmem:[#allocation11 + $0x1a8] sm:$0xff]
    %v1694 = vld [vmem:[#allocation11 + $0x1b0] sm:$0xff]
    %v1695 = vld [vmem:[#allocation11 + $0x1b8] sm:$0xff]
    %v1696 = vld [vmem:[#allocation11 + $0x1c0] sm:$0xff]
    %v1697 = vld [vmem:[#allocation11 + $0x1c8] sm:$0xff]
    %v1698 = vld [vmem:[#allocation11 + $0x1d0] sm:$0xff]
    %v1699 = vld [vmem:[#allocation11 + $0x1d8] sm:$0xff]
    %v1700 = vld [vmem:[#allocation11 + $0x1e0] sm:$0xff]
    %v1701 = vld [vmem:[#allocation11 + $0x1e8] sm:$0xff]
    %v1702 = vld [vmem:[#allocation11 + $0x1f0] sm:$0xff]
    %v1703 = vld [vmem:[#allocation11 + $0x1f8] sm:$0xff]
    %v1704 = vld [vmem:[#allocation11 + $0x200] sm:$0xff]
    %v1705 = vld [vmem:[#allocation11 + $0x208] sm:$0xff]
    %v1706 = vld [vmem:[#allocation11 + $0x210] sm:$0xff]
    %v1707 = vld [vmem:[#allocation11 + $0x218] sm:$0xff]
    %v1708 = vld [vmem:[#allocation11 + $0x220] sm:$0xff]
    %v1709 = vld [vmem:[#allocation11 + $0x228] sm:$0xff]
    %v1710 = vld [vmem:[#allocation11 + $0x230] sm:$0xff]
    %v1711 = vld [vmem:[#allocation11 + $0x238] sm:$0xff]
    %v1712 = vld [vmem:[#allocation11 + $0x240] sm:$0xff]
    %v1713 = vld [vmem:[#allocation11 + $0x248] sm:$0xff]
    %v1714 = vld [vmem:[#allocation11 + $0x250] sm:$0xff]
    %v1715 = vld [vmem:[#allocation11 + $0x258] sm:$0xff]
    %v1716 = vld [vmem:[#allocation11 + $0x260] sm:$0xff]
    %v1717 = vld [vmem:[#allocation11 + $0x268] sm:$0xff]
    %v1718 = vld [vmem:[#allocation11 + $0x270] sm:$0xff]
    %v1719 = vld [vmem:[#allocation11 + $0x278] sm:$0xff]
    %v1720 = vld [vmem:[#allocation11 + $0x280] sm:$0xff]
    %v1721 = vld [vmem:[#allocation11 + $0x288] sm:$0xff]
    %v1722 = vld [vmem:[#allocation11 + $0x290] sm:$0xff]
    %v1723 = vld [vmem:[#allocation11 + $0x298] sm:$0xff]
    %v1724 = vld [vmem:[#allocation11 + $0x2a0] sm:$0xff]
    %v1725 = vld [vmem:[#allocation11 + $0x2a8] sm:$0xff]
    %v1726 = vld [vmem:[#allocation11 + $0x2b0] sm:$0xff]
    %v1727 = vld [vmem:[#allocation11 + $0x2b8] sm:$0xff]
    %v1728 = vld [vmem:[#allocation11 + $0x2c0] sm:$0xff]
    %v1729 = vld [vmem:[#allocation11 + $0x2c8] sm:$0xff]
    %v1730 = vld [vmem:[#allocation11 + $0x2d0] sm:$0xff]
    %v1731 = vld [vmem:[#allocation11 + $0x2d8] sm:$0xff]
    %v1732 = vld [vmem:[#allocation11 + $0x2e0] sm:$0xff]
    %v1733 = vld [vmem:[#allocation11 + $0x2e8] sm:$0xff]
    %v1734 = vld [vmem:[#allocation11 + $0x2f0] sm:$0xff]
    %v1735 = vld [vmem:[#allocation11 + $0x2f8] sm:$0xff]
    %v1736 = vld [vmem:[#allocation13] sm:$0x7]
    %v1738 = vlaneseq
    %v1739 = vshrl.u32 %v1738, 7
    %v1740 = vsub.s32 0, %v1739
    %v1741 = vrot.slane %v1736, %v1740
    %v1742 = vlaneseq
    %v1743 = vshrl.u32 %v1742, 7
    %v1744 = vsub.s32 1, %v1743
    %v1745 = vrot.slane %v1736, %v1744
    %v1746 = vlaneseq
    %v1747 = vshrl.u32 %v1746, 7
    %v1748 = vsub.s32 2, %v1747
    %v1749 = vrot.slane %v1736, %v1748
    %1753 = vmatprep.subr.mxu0 %v1641
    %1754 = vmatpush1.msra.mxu0 %v1640
    %1755 = vmatprep.subr.mxu0 %v1644
    %1756 = vmatpush1.msra.mxu0 %v1643
    %1757 = vmatprep.subr.mxu0 %v1647
    %1758 = vmatpush1.msra.mxu0 %v1646
    %1759 = vmatprep.subr.mxu0 %v1650
    %1760 = vmatpush1.msra.mxu0 %v1649
    %1761 = vmatprep.subr.mxu0 %v1653
    %1762 = vmatpush1.msra.mxu0 %v1652
    %1763 = vmatprep.subr.mxu0 %v1656
    %1764 = vmatpush1.msra.mxu0 %v1655
    %1765 = vmatprep.subr.mxu0 %v1659
    %1766 = vmatpush1.msra.mxu0 %v1658
    %1767 = vmatprep.subr.mxu0 %v1662
    %1768 = vmatpush1.msra.mxu0 %v1661
    %1769 = vmatprep.subr.mxu0 %v1665
    %1770 = vmatpush1.msra.mxu0 %v1664
    %1771 = vmatprep.subr.mxu0 %v1668
    %1772 = vmatpush1.msra.mxu0 %v1667
    %1773 = vmatprep.subr.mxu0 %v1671
    %1774 = vmatpush1.msra.mxu0 %v1670
    %1775 = vmatprep.subr.mxu0 %v1674
    %1776 = vmatpush1.msra.mxu0 %v1673
    %1777 = vmatprep.subr.mxu0 %v1677
    %1778 = vmatpush1.msra.mxu0 %v1676
    %1779 = vmatprep.subr.mxu0 %v1680
    %1780 = vmatpush1.msra.mxu0 %v1679
    %1781 = vmatprep.subr.mxu0 %v1683
    %1782 = vmatpush1.msra.mxu0 %v1682
    %1783 = vmatprep.subr.mxu0 %v1686
    %1784 = vmatpush1.msra.mxu0 %v1685
    %1785 = vmatprep.subr.mxu0 %v1689
    %1786 = vmatpush1.msra.mxu0 %v1688
    %1787 = vmatprep.subr.mxu0 %v1692
    %1788 = vmatpush1.msra.mxu0 %v1691
    %1789 = vmatprep.subr.mxu0 %v1695
    %1790 = vmatpush1.msra.mxu0 %v1694
    %1791 = vmatprep.subr.mxu0 %v1698
    %1792 = vmatpush1.msra.mxu0 %v1697
    %1793 = vmatprep.subr.mxu0 %v1701
    %1794 = vmatpush1.msra.mxu0 %v1700
    %1795 = vmatprep.subr.mxu0 %v1704
    %1796 = vmatpush1.msra.mxu0 %v1703
    %1797 = vmatprep.subr.mxu0 %v1707
    %1798 = vmatpush1.msra.mxu0 %v1706
    %1799 = vmatprep.subr.mxu0 %v1710
    %1800 = vmatpush1.msra.mxu0 %v1709
    %1801 = vmatprep.subr.mxu0 %v1713
    %1802 = vmatpush1.msra.mxu0 %v1712
    %1803 = vmatprep.subr.mxu0 %v1716
    %1804 = vmatpush1.msra.mxu0 %v1715
    %1805 = vmatprep.subr.mxu0 %v1719
    %1806 = vmatpush1.msra.mxu0 %v1718
    %1807 = vmatprep.subr.mxu0 %v1722
    %1808 = vmatpush1.msra.mxu0 %v1721
    %1809 = vmatprep.subr.mxu0 %v1725
    %1810 = vmatpush1.msra.mxu0 %v1724
    %1811 = vmatprep.subr.mxu0 %v1728
    %1812 = vmatpush1.msra.mxu0 %v1727
    %1813 = vmatprep.subr.mxu0 %v1731
    %1814 = vmatpush1.msra.mxu0 %v1730
    %1815 = vmatprep.subr.mxu0 %v1734
    %1816 = vmatpush1.msra.mxu0 %v1733
    %1817 = vmatprep.mubr.f32.mxu0 %v1639
    %1818 = vmatmul.mubr.f32.gmra.mrb[0].mxu0 %v1638
    %v1819 = vpop.f32.mrb[0].mxu0
    %v1820 = vadd.f32 %v1741, %v1819
    %v1821 = vpop.f32.mrb[0].mxu0
    %v1822 = vadd.f32 %v1745, %v1821
    %1823 = vdwg.mxu0
    %1824 = vmatprep.subr.mxu0 0.0
    %1825 = vmatpush1.msra.mxu0 %v1642
    %1826 = vmatprep.subr.mxu0 0.0
    %1827 = vmatpush1.msra.mxu0 %v1645
    %1828 = vmatprep.subr.mxu0 0.0
    %1829 = vmatpush1.msra.mxu0 %v1648
    %1830 = vmatprep.subr.mxu0 0.0
    %1831 = vmatpush1.msra.mxu0 %v1651
    %1832 = vmatprep.subr.mxu0 0.0
    %1833 = vmatpush1.msra.mxu0 %v1654
    %1834 = vmatprep.subr.mxu0 0.0
    %1835 = vmatpush1.msra.mxu0 %v1657
    %1836 = vmatprep.subr.mxu0 0.0
    %1837 = vmatpush1.msra.mxu0 %v1660
    %1838 = vmatprep.subr.mxu0 0.0
    %1839 = vmatpush1.msra.mxu0 %v1663
    %1840 = vmatprep.subr.mxu0 0.0
    %1841 = vmatpush1.msra.mxu0 %v1666
    %1842 = vmatprep.subr.mxu0 0.0
    %1843 = vmatpush1.msra.mxu0 %v1669
    %1844 = vmatprep.subr.mxu0 0.0
    %1845 = vmatpush1.msra.mxu0 %v1672
    %1846 = vmatprep.subr.mxu0 0.0
    %1847 = vmatpush1.msra.mxu0 %v1675
    %1848 = vmatprep.subr.mxu0 0.0
    %1849 = vmatpush1.msra.mxu0 %v1678
    %1850 = vmatprep.subr.mxu0 0.0
    %1851 = vmatpush1.msra.mxu0 %v1681
    %1852 = vmatprep.subr.mxu0 0.0
    %1853 = vmatpush1.msra.mxu0 %v1684
    %1854 = vmatprep.subr.mxu0 0.0
    %1855 = vmatpush1.msra.mxu0 %v1687
    %1856 = vmatprep.subr.mxu0 0.0
    %1857 = vmatpush1.msra.mxu0 %v1690
    %1858 = vmatprep.subr.mxu0 0.0
    %1859 = vmatpush1.msra.mxu0 %v1693
    %1860 = vmatprep.subr.mxu0 0.0
    %1861 = vmatpush1.msra.mxu0 %v1696
    %1862 = vmatprep.subr.mxu0 0.0
    %1863 = vmatpush1.msra.mxu0 %v1699
    %1864 = vmatprep.subr.mxu0 0.0
    %1865 = vmatpush1.msra.mxu0 %v1702
    %1866 = vmatprep.subr.mxu0 0.0
    %1867 = vmatpush1.msra.mxu0 %v1705
    %1868 = vmatprep.subr.mxu0 0.0
    %1869 = vmatpush1.msra.mxu0 %v1708
    %1870 = vmatprep.subr.mxu0 0.0
    %1871 = vmatpush1.msra.mxu0 %v1711
    %1872 = vmatprep.subr.mxu0 0.0
    %1873 = vmatpush1.msra.mxu0 %v1714
    %1874 = vmatprep.subr.mxu0 0.0
    %1875 = vmatpush1.msra.mxu0 %v1717
    %1876 = vmatprep.subr.mxu0 0.0
    %1877 = vmatpush1.msra.mxu0 %v1720
    %1878 = vmatprep.subr.mxu0 0.0
    %1879 = vmatpush1.msra.mxu0 %v1723
    %1880 = vmatprep.subr.mxu0 0.0
    %1881 = vmatpush1.msra.mxu0 %v1726
    %1882 = vmatprep.subr.mxu0 0.0
    %1883 = vmatpush1.msra.mxu0 %v1729
    %1884 = vmatprep.subr.mxu0 0.0
    %1885 = vmatpush1.msra.mxu0 %v1732
    %1886 = vmatprep.subr.mxu0 0.0
    %1887 = vmatpush1.msra.mxu0 %v1735
    %1888 = vmatprep.mubr.f32.mxu0 %v1639
    %1889 = vmatmul.mubr.f32.gmra.mrb[0].mxu0 %v1638
    %v1890 = vpop.f32.mrb[0].mxu0
    %v1891 = vadd.f32 %v1749, %v1890
    %v1892 = vpop.f32.mrb[0].mxu0
    %1893 = vdwg.mxu0
    %v1894 = vmax.f32 %v1820, 0.0
    %v1895 = vmax.f32 %v1822, 0.0
    %v1896 = vmax.f32 %v1891, 0.0
    %v1897 = vmax.f32 %v1894, %v1895
    %v1898 = vmax.f32 %v1897, %v1896
    %v1899 = vld [vmem:[#allocation14] sm:$0xff]
    %v1900 = vld [vmem:[#allocation14 + $0x8] sm:$0xff]
    %v1901 = vld [vmem:[#allocation14 + $0x10] sm:$0xff]
    %v1902 = vld [vmem:[#allocation14 + $0x18] sm:$0xff]
    %v1903 = vld [vmem:[#allocation14 + $0x20] sm:$0xff]
    %v1904 = vld [vmem:[#allocation14 + $0x28] sm:$0xff]
    %v1905 = vld [vmem:[#allocation14 + $0x30] sm:$0xff]
    %v1906 = vld [vmem:[#allocation14 + $0x38] sm:$0xff]
    %v1907 = vld [vmem:[#allocation14 + $0x40] sm:$0xff]
    %v1908 = vld [vmem:[#allocation14 + $0x48] sm:$0xff]
    %v1909 = vld [vmem:[#allocation14 + $0x50] sm:$0xff]
    %v1910 = vld [vmem:[#allocation14 + $0x58] sm:$0xff]
    %v1911 = vld [vmem:[#allocation14 + $0x60] sm:$0xff]
    %v1912 = vld [vmem:[#allocation14 + $0x68] sm:$0xff]
    %v1913 = vld [vmem:[#allocation14 + $0x70] sm:$0xff]
    %v1914 = vld [vmem:[#allocation14 + $0x78] sm:$0xff]
    %v1915 = vld [vmem:[#allocation16] sm:$0x1]
    %v1917 = vlaneseq
    %v1918 = vshrl.u32 %v1917, 7
    %v1919 = vsub.s32 0, %v1918
    %v1920 = vrot.slane %v1915, %v1919
    %1922 = vmatprep.subr.mxu0 0.0
    %1923 = vmatpush1.msra.mxu0 %v1899
    %1924 = vmatprep.subr.mxu0 0.0
    %1925 = vmatpush1.msra.mxu0 %v1900
    %1926 = vmatprep.subr.mxu0 0.0
    %1927 = vmatpush1.msra.mxu0 %v1901
    %1928 = vmatprep.subr.mxu0 0.0
    %1929 = vmatpush1.msra.mxu0 %v1902
    %1930 = vmatprep.subr.mxu0 0.0
    %1931 = vmatpush1.msra.mxu0 %v1903
    %1932 = vmatprep.subr.mxu0 0.0
    %1933 = vmatpush1.msra.mxu0 %v1904
    %1934 = vmatprep.subr.mxu0 0.0
    %1935 = vmatpush1.msra.mxu0 %v1905
    %1936 = vmatprep.subr.mxu0 0.0
    %1937 = vmatpush1.msra.mxu0 %v1906
    %1938 = vmatprep.subr.mxu0 0.0
    %1939 = vmatpush1.msra.mxu0 %v1907
    %1940 = vmatprep.subr.mxu0 0.0
    %1941 = vmatpush1.msra.mxu0 %v1908
    %1942 = vmatprep.subr.mxu0 0.0
    %1943 = vmatpush1.msra.mxu0 %v1909
    %1944 = vmatprep.subr.mxu0 0.0
    %1945 = vmatpush1.msra.mxu0 %v1910
    %1946 = vmatprep.subr.mxu0 0.0
    %1947 = vmatpush1.msra.mxu0 %v1911
    %1948 = vmatprep.subr.mxu0 0.0
    %1949 = vmatpush1.msra.mxu0 %v1912
    %1950 = vmatprep.subr.mxu0 0.0
    %1951 = vmatpush1.msra.mxu0 %v1913
    %1952 = vmatprep.subr.mxu0 0.0
    %1953 = vmatpush1.msra.mxu0 %v1914
    %1954 = vmatprep.subr.mxu0 0.0
    %1955 = vmatpush1.msra.mxu0 0.0
    %1956 = vmatprep.subr.mxu0 0.0
    %1957 = vmatpush1.msra.mxu0 0.0
    %1958 = vmatprep.subr.mxu0 0.0
    %1959 = vmatpush1.msra.mxu0 0.0
    %1960 = vmatprep.subr.mxu0 0.0
    %1961 = vmatpush1.msra.mxu0 0.0
    %1962 = vmatprep.subr.mxu0 0.0
    %1963 = vmatpush1.msra.mxu0 0.0
    %1964 = vmatprep.subr.mxu0 0.0
    %1965 = vmatpush1.msra.mxu0 0.0
    %1966 = vmatprep.subr.mxu0 0.0
    %1967 = vmatpush1.msra.mxu0 0.0
    %1968 = vmatprep.subr.mxu0 0.0
    %1969 = vmatpush1.msra.mxu0 0.0
    %1970 = vmatprep.subr.mxu0 0.0
    %1971 = vmatpush1.msra.mxu0 0.0
    %1972 = vmatprep.subr.mxu0 0.0
    %1973 = vmatpush1.msra.mxu0 0.0
    %1974 = vmatprep.subr.mxu0 0.0
    %1975 = vmatpush1.msra.mxu0 0.0
    %1976 = vmatprep.subr.mxu0 0.0
    %1977 = vmatpush1.msra.mxu0 0.0
    %1978 = vmatprep.subr.mxu0 0.0
    %1979 = vmatpush1.msra.mxu0 0.0
    %1980 = vmatprep.subr.mxu0 0.0
    %1981 = vmatpush1.msra.mxu0 0.0
    %1982 = vmatprep.subr.mxu0 0.0
    %1983 = vmatpush1.msra.mxu0 0.0
    %1984 = vmatprep.subr.mxu0 0.0
    %1985 = vmatpush1.msra.mxu0 0.0
    %1986 = vmatprep.mubr.f32.mxu0 0.0
    %1987 = vmatmul.mubr.f32.gmra.mrb[0].mxu0 %v1898
    %v1988 = vpop.f32.mrb[0].mxu0
    %v1989 = vadd.f32 %v1920, %v1988
    %v1990 = vpop.f32.mrb[0].mxu0
    %1991 = vdwg.mxu0
    %v1992 = vmax.f32 %v1989, 0.0
    %v1993 = vld [vmem:[#allocation17] sm:$0xff]
    %v1994 = vld [vmem:[#allocation17 + $0x8] sm:$0xff]
    %v1995 = vld [vmem:[#allocation17 + $0x10] sm:$0xff]
    %v1996 = vld [vmem:[#allocation17 + $0x18] sm:$0xff]
    %v1997 = vld [vmem:[#allocation17 + $0x20] sm:$0xff]
    %v1998 = vld [vmem:[#allocation17 + $0x28] sm:$0xff]
    %v1999 = vld [vmem:[#allocation17 + $0x30] sm:$0xff]
    %v2000 = vld [vmem:[#allocation17 + $0x38] sm:$0xff]
    %v2001 = vld [vmem:[#allocation17 + $0x40] sm:$0xff]
    %v2002 = vld [vmem:[#allocation17 + $0x48] sm:$0xff]
    %v2003 = vld [vmem:[#allocation17 + $0x50] sm:$0xff]
    %v2004 = vld [vmem:[#allocation17 + $0x58] sm:$0xff]
    %v2005 = vld [vmem:[#allocation17 + $0x60] sm:$0xff]
    %v2006 = vld [vmem:[#allocation17 + $0x68] sm:$0xff]
    %v2007 = vld [vmem:[#allocation17 + $0x70] sm:$0xff]
    %v2008 = vld [vmem:[#allocation17 + $0x78] sm:$0xff]
    %v2009 = vld [vmem:[#allocation19] sm:$0x1]
    %v2011 = vlaneseq
    %v2012 = vshrl.u32 %v2011, 7
    %v2013 = vsub.s32 0, %v2012
    %v2014 = vrot.slane %v2009, %v2013
    %2016 = vmatprep.subr.mxu0 0.0
    %2017 = vmatpush1.msra.mxu0 %v1993
    %2018 = vmatprep.subr.mxu0 0.0
    %2019 = vmatpush1.msra.mxu0 %v1994
    %2020 = vmatprep.subr.mxu0 0.0
    %2021 = vmatpush1.msra.mxu0 %v1995
    %2022 = vmatprep.subr.mxu0 0.0
    %2023 = vmatpush1.msra.mxu0 %v1996
    %2024 = vmatprep.subr.mxu0 0.0
    %2025 = vmatpush1.msra.mxu0 %v1997
    %2026 = vmatprep.subr.mxu0 0.0
    %2027 = vmatpush1.msra.mxu0 %v1998
    %2028 = vmatprep.subr.mxu0 0.0
    %2029 = vmatpush1.msra.mxu0 %v1999
    %2030 = vmatprep.subr.mxu0 0.0
    %2031 = vmatpush1.msra.mxu0 %v2000
    %2032 = vmatprep.subr.mxu0 0.0
    %2033 = vmatpush1.msra.mxu0 %v2001
    %2034 = vmatprep.subr.mxu0 0.0
    %2035 = vmatpush1.msra.mxu0 %v2002
    %2036 = vmatprep.subr.mxu0 0.0
    %2037 = vmatpush1.msra.mxu0 %v2003
    %2038 = vmatprep.subr.mxu0 0.0
    %2039 = vmatpush1.msra.mxu0 %v2004
    %2040 = vmatprep.subr.mxu0 0.0
    %2041 = vmatpush1.msra.mxu0 %v2005
    %2042 = vmatprep.subr.mxu0 0.0
    %2043 = vmatpush1.msra.mxu0 %v2006
    %2044 = vmatprep.subr.mxu0 0.0
    %2045 = vmatpush1.msra.mxu0 %v2007
    %2046 = vmatprep.subr.mxu0 0.0
    %2047 = vmatpush1.msra.mxu0 %v2008
    %2048 = vmatprep.subr.mxu0 0.0
    %2049 = vmatpush1.msra.mxu0 0.0
    %2050 = vmatprep.subr.mxu0 0.0
    %2051 = vmatpush1.msra.mxu0 0.0
    %2052 = vmatprep.subr.mxu0 0.0
    %2053 = vmatpush1.msra.mxu0 0.0
    %2054 = vmatprep.subr.mxu0 0.0
    %2055 = vmatpush1.msra.mxu0 0.0
    %2056 = vmatprep.subr.mxu0 0.0
    %2057 = vmatpush1.msra.mxu0 0.0
    %2058 = vmatprep.subr.mxu0 0.0
    %2059 = vmatpush1.msra.mxu0 0.0
    %2060 = vmatprep.subr.mxu0 0.0
    %2061 = vmatpush1.msra.mxu0 0.0
    %2062 = vmatprep.subr.mxu0 0.0
    %2063 = vmatpush1.msra.mxu0 0.0
    %2064 = vmatprep.subr.mxu0 0.0
    %2065 = vmatpush1.msra.mxu0 0.0
    %2066 = vmatprep.subr.mxu0 0.0
    %2067 = vmatpush1.msra.mxu0 0.0
    %2068 = vmatprep.subr.mxu0 0.0
    %2069 = vmatpush1.msra.mxu0 0.0
    %2070 = vmatprep.subr.mxu0 0.0
    %2071 = vmatpush1.msra.mxu0 0.0
    %2072 = vmatprep.subr.mxu0 0.0
    %2073 = vmatpush1.msra.mxu0 0.0
    %2074 = vmatprep.subr.mxu0 0.0
    %2075 = vmatpush1.msra.mxu0 0.0
    %2076 = vmatprep.subr.mxu0 0.0
    %2077 = vmatpush1.msra.mxu0 0.0
    %2078 = vmatprep.subr.mxu0 0.0
    %2079 = vmatpush1.msra.mxu0 0.0
    %2080 = vmatprep.mubr.f32.mxu0 0.0
    %2081 = vmatmul.mubr.f32.gmra.mrb[0].mxu0 %v1992
    %v2082 = vpop.f32.mrb[0].mxu0
    %v2083 = vadd.f32 %v2014, %v2082
    %v2084 = vpop.f32.mrb[0].mxu0
    %2085 = vdwg.mxu0
    %2086 = vst [vmem:[#allocation20] sm:$0xff] %v2083
    // Predicated region
    $region90: #{tpu_custom_call.1} parent=1 // pred_check
      _
    $region91: #{tpu_custom_call.1} parent=1 // pred_check_branch
      %2088 = sbr.rel (0) target = $region93
    $region92: #{tpu_custom_call.1} parent=1 // pred_region
      %s2090 = ssub.s32 128, 128
      %2091 = vsyncadd [#allocation4], %s2090
      %s2093 = sshll.u32 [#allocation20], 4
      %s2094 = int_to_ptr.vmem [resolvable:$true] %s2093
      %2096 = dma.vmem_to_hbm [thread:$0]  %s2094, 128, %s11, [#allocation4]
    $region93: #{tpu_custom_call.1} parent=1 // pred_fallthru
      _
    // Predicated region
    $region94: #{tpu_custom_call.1} parent=1 // pred_check
      _
    $region95: #{tpu_custom_call.1} parent=1 // pred_check_branch
      %2098 = sbr.rel (0) target = $region97
    $region96: #{tpu_custom_call.1} parent=1 // pred_region
      %2099 = dma.done [#allocation4], 128
    $region97: #{tpu_custom_call.1} parent=1 // pred_fallthru
      _
    %2100 = vsyncpa [#allocation3], 1
    %2101 = vsyncpa [#allocation6], 1
    %2102 = vsyncpa [#allocation9], 1
    %2103 = vsyncpa [#allocation12], 1
    %2104 = vsyncpa [#allocation15], 1
    %2105 = vsyncpa [#allocation18], 1
    %2106 = vsyncpa [#allocation4], 1

</llo_original>
